<compile_context>
chip_gen: v5e
topology: v5e:2x2
jax: 0.10.0
libtpu: 0.0.40
codegen_flags: <defaults>
</compile_context>

<pallas_src>
import jax
import jax.numpy as jnp
from jax.experimental import pallas as pl
from jax.experimental.pallas import tpu as pltpu

LOG_SIG_MAX = 2.0
LOG_SIG_MIN = -20.0


# ---------------------------------------------------------------------------
# Fused kernel: wavefront-stacked LSTM + MLP trunk + fused heads.
# x is passed time-major and flattened: (T*B, In).  Head output is a single
# lane-dense (T*B, 2A) slab; the wrapper handles layout plumbing.
# ---------------------------------------------------------------------------
def policy_kernel(x_ref, h0_ref, c0_ref, w_ih0_ref, w_cat_ref, w_hh_last_ref,
                  b_ref, w1_ref, b1_ref, w2_ref, b2_ref, wh_ref, bh_ref,
                  head_ref, hn_ref, cn_ref, seq_scr):
    L, B, H = h0_ref.shape
    TB = x_ref.shape[0]
    T = TB // B
    A = head_ref.shape[1] // 2

    def mm(a, b):
        # Single-pass bf16 MXU matmul with f32 accumulation.
        return jnp.dot(a.astype(jnp.bfloat16), b.astype(jnp.bfloat16),
                       preferred_element_type=jnp.float32)

    # ---- hoisted layer-0 input projection for the whole sequence -----------
    seq_in0 = mm(x_ref[...], w_ih0_ref[...]) + b_ref[0]          # (T*B, 4H) f32

    # Recurrent weights / biases loaded once (VMEM resident, bf16).
    w_cat = [w_cat_ref[l] for l in range(L - 1)]   # (H, 8H): [w_hh_l | w_ih_{l+1}]
    w_hh_last = w_hh_last_ref[...]                 # (H, 4H)
    biases = [b_ref[l] for l in range(L)]          # (1, 4H) each

    h = [h0_ref[l] for l in range(L)]              # (B, H) f32 per layer
    c = [c0_ref[l] for l in range(L)]

    def lstm_step(gates, c_prev):
        # PyTorch gate order: i, f, g, o.  Full-width EUP ops, then lane slices.
        sig = jax.nn.sigmoid(gates)
        tan = jnp.tanh(gates)
        i_g = sig[:, 0 * H:1 * H]
        f_g = sig[:, 1 * H:2 * H]
        g_g = tan[:, 2 * H:3 * H]
        o_g = sig[:, 3 * H:4 * H]
        c_new = f_g * c_prev + i_g * g_g
        h_new = o_g * jnp.tanh(c_new)
        return h_new, c_new

    # ---- software wavefront: diagonal d handles (layer l, timestep d - l) ---
    for d in range(T + L - 1):                       # static: fully unrolled
        h_prev = list(h)                             # snapshot of last diagonal

        # Per-diagonal matmuls.  Each uses only last-diagonal values, so all of
        # them (and all per-layer gate math below) are independent chains the
        # scheduler can interleave.
        rec = [None] * L       # rec[l]    = h_{l,t-1} @ w_hh_l
        inproj = [None] * L    # inproj[l] = h_{l-1,t} @ w_ih_l
        for l in range(L - 1):
            need_rec = 0 <= d - l <= T - 1           # layer l active this diag
            need_in = 0 <= d - l - 1 <= T - 1        # layer l+1 active this diag
            if need_rec or need_in:
                # One N=256 MXU pass serves both consumers of h_prev[l].
                fused = mm(h_prev[l], w_cat[l])      # (B, 8H)
                if need_rec:
                    rec[l] = fused[:, :4 * H]
                if need_in:
                    inproj[l + 1] = fused[:, 4 * H:]
        if 0 <= d - (L - 1) <= T - 1:
            rec[L - 1] = mm(h_prev[L - 1], w_hh_last)

        # Gate math + state update for every active layer.
        for l in range(L):
            t = d - l
            if not (0 <= t <= T - 1):
                continue
            if l == 0:
                gates = seq_in0[t * B:(t + 1) * B, :] + rec[0]   # bias folded
            else:
                gates = inproj[l] + rec[l] + biases[l]
            h_new, c_new = lstm_step(gates, c[l])
            h[l] = h_new
            c[l] = c_new
            if l == L - 1:
                # top-layer output sequence; 8-row aligned f32 stores
                seq_scr[t * B:(t + 1) * B, :] = h_new

    for l in range(L):
        hn_ref[l] = h[l]
        cn_ref[l] = c[l]

    # ---- feed-forward trunk + fused heads, whole sequence at once (M = T*B) -
    feats = seq_scr[...]                                            # (T*B, H)
    h1 = jnp.maximum(mm(feats, w1_ref[...]) + b1_ref[...], 0.0)
    h2 = jnp.maximum(mm(h1, w2_ref[...]) + b2_ref[...], 0.0)
    head = mm(h2, wh_ref[...]) + bh_ref[...]                        # (T*B, 2A)
    # clamp only the log_std columns (lane index >= A), single slab write
    col = jax.lax.broadcasted_iota(jnp.int32, head.shape, 1)
    clipped = jnp.clip(head, LOG_SIG_MIN, LOG_SIG_MAX)
    head_ref[...] = jnp.where(col >= A, clipped, head)


# ---------------------------------------------------------------------------
# One-time parameter packing (hoisted out of the per-call jitted path):
# bf16 weight casts, fused [w_hh_l | w_ih_{l+1}] stacks, fused head weights.
# ---------------------------------------------------------------------------
def pack_params(params):
    bf16 = lambda a: a.astype(jnp.bfloat16)
    L, H, H4 = params["w_hh"].shape
    if L > 1:
        w_cat = jnp.concatenate([params["w_hh"][:L - 1],
                                 params["w_ih"][1:]], axis=2)       # (L-1, H, 8H)
    else:
        w_cat = jnp.zeros((1, H, 2 * H4), params["w_hh"].dtype)     # unused dummy
    return dict(
        w_ih0=bf16(params["w_ih0"]),
        w_cat=bf16(w_cat),
        w_hh_last=bf16(params["w_hh"][L - 1]),
        b=params["b"],
        w1=bf16(params["w1"]), b1=params["b1"],
        w2=bf16(params["w2"]), b2=params["b2"],
        wh=bf16(jnp.concatenate([params["wm"], params["ws"]], axis=1)),
        bh=jnp.concatenate([params["bm"], params["bs"]], axis=1),
    )


# ---------------------------------------------------------------------------
# Wrapper
# ---------------------------------------------------------------------------
@jax.jit
def gaussian_policy_forward(x, h0, c0, packed):
    """x: (B, T, num_inputs) batch_first; h0/c0: (L, B, H); packed from
    pack_params().  Returns mean, log_std in (B, T, A) and (hn, cn)."""
    B, T, In = x.shape
    L, _, H = h0.shape
    A2 = packed["wh"].shape[1]
    A = A2 // 2

    # time-major flattened activations for the hoisted layer-0 projection
    x_tm = jnp.transpose(x, (1, 0, 2)).reshape(T * B, In).astype(jnp.bfloat16)

    head_tm, hn, cn = pl.pallas_call(
        policy_kernel,
        out_shape=(jax.ShapeDtypeStruct((T * B, A2), jnp.float32),
                   jax.ShapeDtypeStruct((L, B, H), jnp.float32),
                   jax.ShapeDtypeStruct((L, B, H), jnp.float32)),
        scratch_shapes=[pltpu.VMEM((T * B, H), jnp.float32)],
    )(x_tm, h0, c0, packed["w_ih0"], packed["w_cat"], packed["w_hh_last"],
      packed["b"], packed["w1"], packed["b1"], packed["w2"], packed["b2"],
      packed["wh"], packed["bh"])

    head = jnp.transpose(head_tm.reshape(T, B, A2), (1, 0, 2))      # (B, T, 2A)
    return head[..., :A], head[..., A:], hn, cn


# ---------------------------------------------------------------------------
# Deterministic parameter init (matches the PyTorch module's shapes)
# ---------------------------------------------------------------------------
def init_params(key, num_inputs, num_actions, hidden_dim, num_layers):
    In, A, H, L = num_inputs, num_actions, hidden_dim, num_layers
    ks = iter(jax.random.split(key, 4 * L + 8))
    bound = 1.0 / (H ** 0.5)                        # PyTorch LSTM default init

    def u(shape):
        return jax.random.uniform(next(ks), shape, jnp.float32, -bound, bound)

    def xavier(fan_in, fan_out):                    # xavier_uniform_, gain=1
        lim = (6.0 / (fan_in + fan_out)) ** 0.5
        return jax.random.uniform(next(ks), (fan_in, fan_out), jnp.float32,
                                  -lim, lim)

    # weights stored pre-transposed for `x @ W`
    w_ih0 = u((In, 4 * H))                          # layer 0: (In, 4H)
    w_ih = [jnp.zeros((H, 4 * H), jnp.float32)]     # layer-0 slot unused
    w_hh = [u((H, 4 * H))]
    b = [u((4 * H,)) + u((4 * H,))]                 # b_ih + b_hh
    for _ in range(1, L):
        w_ih.append(u((H, 4 * H)))
        w_hh.append(u((H, 4 * H)))
        b.append(u((4 * H,)) + u((4 * H,)))

    return dict(
        w_ih0=w_ih0,
        w_ih=jnp.stack(w_ih),                       # (L, H, 4H)
        w_hh=jnp.stack(w_hh),                       # (L, H, 4H)
        b=jnp.stack(b)[:, None, :],                 # (L, 1, 4H)
        w1=xavier(H, H), b1=jnp.zeros((1, H), jnp.float32),
        w2=xavier(H, H), b2=jnp.zeros((1, H), jnp.float32),
        wm=xavier(H, A), bm=jnp.zeros((1, A), jnp.float32),
        ws=xavier(H, A), bs=jnp.zeros((1, A), jnp.float32),
    )


# ---------------------------------------------------------------------------
# Pure-JAX f32 reference (same semantics as the PyTorch forward)
# ---------------------------------------------------------------------------
def reference_forward(x, h0, c0, params):
    PREC = jax.lax.Precision.HIGHEST
    B, T, _ = x.shape
    L, _, H = h0.shape
    hs = [h0[l] for l in range(L)]
    cs = [c0[l] for l in range(L)]
    outs = []
    for t in range(T):
        inp = x[:, t, :]
        for l in range(L):
            w_in = params["w_ih0"] if l == 0 else params["w_ih"][l]
            gates = (jnp.dot(inp, w_in, precision=PREC)
                     + jnp.dot(hs[l], params["w_hh"][l], precision=PREC)
                     + params["b"][l])
            i_g = jax.nn.sigmoid(gates[:, :H])
            f_g = jax.nn.sigmoid(gates[:, H:2 * H])
            g_g = jnp.tanh(gates[:, 2 * H:3 * H])
            o_g = jax.nn.sigmoid(gates[:, 3 * H:])
            cs[l] = f_g * cs[l] + i_g * g_g
            hs[l] = o_g * jnp.tanh(cs[l])
            inp = hs[l]
        outs.append(inp)
    out = jnp.stack(outs, axis=1)                   # (B, T, H)
    h1 = jax.nn.relu(jnp.dot(out, params["w1"], precision=PREC) + params["b1"])
    h2 = jax.nn.relu(jnp.dot(h1, params["w2"], precision=PREC) + params["b2"])
    mean = jnp.dot(h2, params["wm"], precision=PREC) + params["bm"]
    log_std = jnp.clip(jnp.dot(h2, params["ws"], precision=PREC) + params["bs"],
                       LOG_SIG_MIN, LOG_SIG_MAX)
    return mean, log_std, jnp.stack(hs), jnp.stack(cs)


if __name__ == "__main__":
    # small shapes: batch=8, seq=8, num_inputs=16, hidden_dim=32,
    # num_actions=4, num_layers=2
    B, T, In, H, A, L = 8, 8, 16, 32, 4, 2

    key = jax.random.PRNGKey(0)
    k_p, k_x, k_h, k_c = jax.random.split(key, 4)
    params = init_params(k_p, In, A, H, L)
    packed = pack_params(params)                    # one-time weight packing
    x = jax.random.normal(k_x, (B, T, In), jnp.float32)
    h0 = jax.random.normal(k_h, (L, B, H), jnp.float32)   # self.hidden[0]
    c0 = jax.random.normal(k_c, (L, B, H), jnp.float32)   # self.hidden[1]

    mean, log_std, hn, cn = gaussian_policy_forward(x, h0, c0, packed)
    jax.block_until_ready((mean, log_std, hn, cn))

    ref_mean, ref_log_std, ref_hn, ref_cn = reference_forward(x, h0, c0, params)
    assert mean.shape == (B, T, A) and log_std.shape == (B, T, A)
    assert hn.shape == (L, B, H) and cn.shape == (L, B, H)
    # bf16 MXU inputs vs. a full-f32 reference -> loose (documented) tolerance
    tol = dict(atol=5e-2, rtol=5e-2)
    assert bool(jnp.allclose(mean, ref_mean, **tol))
    assert bool(jnp.allclose(log_std, ref_log_std, **tol))
    assert bool(jnp.allclose(hn, ref_hn, **tol))
    assert bool(jnp.allclose(cn, ref_cn, **tol))

    print("KERNEL_OK")
</pallas_src>

<mosaic_0001>
module attributes {stable_mosaic.version = 11 : i64} {
  func.func @policy_kernel(%arg0: memref<64x16xbf16, #tpu.memory_space<vmem>>, %arg1: memref<2x8x32xf32, #tpu.memory_space<vmem>>, %arg2: memref<2x8x32xf32, #tpu.memory_space<vmem>>, %arg3: memref<16x128xbf16, #tpu.memory_space<vmem>>, %arg4: memref<1x32x256xbf16, #tpu.memory_space<vmem>>, %arg5: memref<32x128xbf16, #tpu.memory_space<vmem>>, %arg6: memref<2x1x128xf32, #tpu.memory_space<vmem>>, %arg7: memref<32x32xbf16, #tpu.memory_space<vmem>>, %arg8: memref<1x32xf32, #tpu.memory_space<vmem>>, %arg9: memref<32x32xbf16, #tpu.memory_space<vmem>>, %arg10: memref<1x32xf32, #tpu.memory_space<vmem>>, %arg11: memref<32x8xbf16, #tpu.memory_space<vmem>>, %arg12: memref<1x8xf32, #tpu.memory_space<vmem>>, %arg13: memref<64x8xf32, #tpu.memory_space<vmem>>, %arg14: memref<2x8x32xf32, #tpu.memory_space<vmem>>, %arg15: memref<2x8x32xf32, #tpu.memory_space<vmem>>, %arg16: memref<64x32xf32, #tpu.memory_space<vmem>>) attributes {dimension_semantics = [], scalar_prefetch = 0 : i64, scratch_operands = 1 : i64, tpu.core_type = #tpu.core_type<tc>} {
    %c0 = arith.constant 0 : index
    %c0_0 = arith.constant 0 : index
    %0 = vector.load %arg0[%c0, %c0_0] : memref<64x16xbf16, #tpu.memory_space<vmem>>, vector<64x16xbf16>
    %c0_1 = arith.constant 0 : index
    %c0_2 = arith.constant 0 : index
    %1 = vector.load %arg3[%c0_1, %c0_2] : memref<16x128xbf16, #tpu.memory_space<vmem>>, vector<16x128xbf16>
    %cst = arith.constant dense<0.000000e+00> : vector<64x128xf32>
    %2 = tpu.matmul %0, %1, %cst {dimension_numbers = #tpu.dot_dimension_numbers<[1], [0], [0], [1], [0, 0, 1, 1], [], []>} : vector<64x16xbf16>, vector<16x128xbf16>, vector<64x128xf32> -> vector<64x128xf32>
    %c0_3 = arith.constant 0 : index
    %c0_4 = arith.constant 0 : index
    %c0_5 = arith.constant 0 : index
    %3 = vector.load %arg6[%c0_3, %c0_4, %c0_5] : memref<2x1x128xf32, #tpu.memory_space<vmem>>, vector<1x1x128xf32>
    %4 = vector.shape_cast %3 : vector<1x1x128xf32> to vector<1x128xf32>
    %5 = vector.broadcast %4 : vector<1x128xf32> to vector<64x128xf32>
    %6 = arith.addf %2, %5 : vector<64x128xf32>
    %c0_6 = arith.constant 0 : index
    %c0_7 = arith.constant 0 : index
    %c0_8 = arith.constant 0 : index
    %7 = vector.load %arg4[%c0_6, %c0_7, %c0_8] : memref<1x32x256xbf16, #tpu.memory_space<vmem>>, vector<1x32x256xbf16>
    %8 = vector.shape_cast %7 : vector<1x32x256xbf16> to vector<32x256xbf16>
    %c0_9 = arith.constant 0 : index
    %c0_10 = arith.constant 0 : index
    %9 = vector.load %arg5[%c0_9, %c0_10] : memref<32x128xbf16, #tpu.memory_space<vmem>>, vector<32x128xbf16>
    %c1 = arith.constant 1 : index
    %c0_11 = arith.constant 0 : index
    %c0_12 = arith.constant 0 : index
    %10 = vector.load %arg6[%c1, %c0_11, %c0_12] : memref<2x1x128xf32, #tpu.memory_space<vmem>>, vector<1x1x128xf32>
    %11 = vector.shape_cast %10 : vector<1x1x128xf32> to vector<1x128xf32>
    %c0_13 = arith.constant 0 : index
    %c0_14 = arith.constant 0 : index
    %c0_15 = arith.constant 0 : index
    %12 = vector.load %arg1[%c0_13, %c0_14, %c0_15] : memref<2x8x32xf32, #tpu.memory_space<vmem>>, vector<1x8x32xf32>
    %13 = vector.shape_cast %12 : vector<1x8x32xf32> to vector<8x32xf32>
    %c1_16 = arith.constant 1 : index
    %c0_17 = arith.constant 0 : index
    %c0_18 = arith.constant 0 : index
    %14 = vector.load %arg1[%c1_16, %c0_17, %c0_18] : memref<2x8x32xf32, #tpu.memory_space<vmem>>, vector<1x8x32xf32>
    %15 = vector.shape_cast %14 : vector<1x8x32xf32> to vector<8x32xf32>
    %c0_19 = arith.constant 0 : index
    %c0_20 = arith.constant 0 : index
    %c0_21 = arith.constant 0 : index
    %16 = vector.load %arg2[%c0_19, %c0_20, %c0_21] : memref<2x8x32xf32, #tpu.memory_space<vmem>>, vector<1x8x32xf32>
    %17 = vector.shape_cast %16 : vector<1x8x32xf32> to vector<8x32xf32>
    %c1_22 = arith.constant 1 : index
    %c0_23 = arith.constant 0 : index
    %c0_24 = arith.constant 0 : index
    %18 = vector.load %arg2[%c1_22, %c0_23, %c0_24] : memref<2x8x32xf32, #tpu.memory_space<vmem>>, vector<1x8x32xf32>
    %19 = vector.shape_cast %18 : vector<1x8x32xf32> to vector<8x32xf32>
    %20 = arith.truncf %13 : vector<8x32xf32> to vector<8x32xbf16>
    %cst_25 = arith.constant dense<0.000000e+00> : vector<8x256xf32>
    %21 = tpu.matmul %20, %8, %cst_25 {dimension_numbers = #tpu.dot_dimension_numbers<[1], [0], [0], [1], [0, 0, 1, 1], [], []>} : vector<8x32xbf16>, vector<32x256xbf16>, vector<8x256xf32> -> vector<8x256xf32>
    %22 = vector.extract_strided_slice %21 {offsets = [0, 0], sizes = [8, 128], strides = [1, 1]} : vector<8x256xf32> to vector<8x128xf32>
    %23 = vector.extract_strided_slice %6 {offsets = [0, 0], sizes = [8, 128], strides = [1, 1]} : vector<64x128xf32> to vector<8x128xf32>
    %24 = arith.addf %23, %22 : vector<8x128xf32>
    %25 = arith.negf %24 : vector<8x128xf32>
    %26 = math.exp %25 : vector<8x128xf32>
    %cst_26 = arith.constant 1.000000e+00 : f32
    %27 = vector.broadcast %cst_26 : f32 to vector<8x128xf32>
    %28 = arith.addf %27, %26 : vector<8x128xf32>
    %29 = arith.divf %27, %28 : vector<8x128xf32>
    %30 = math.tanh %24 : vector<8x128xf32>
    %31 = vector.extract_strided_slice %29 {offsets = [0, 0], sizes = [8, 32], strides = [1, 1]} : vector<8x128xf32> to vector<8x32xf32>
    %32 = vector.extract_strided_slice %29 {offsets = [0, 32], sizes = [8, 32], strides = [1, 1]} : vector<8x128xf32> to vector<8x32xf32>
    %33 = vector.extract_strided_slice %30 {offsets = [0, 64], sizes = [8, 32], strides = [1, 1]} : vector<8x128xf32> to vector<8x32xf32>
    %34 = vector.extract_strided_slice %29 {offsets = [0, 96], sizes = [8, 32], strides = [1, 1]} : vector<8x128xf32> to vector<8x32xf32>
    %35 = arith.mulf %32, %17 : vector<8x32xf32>
    %36 = arith.mulf %31, %33 : vector<8x32xf32>
    %37 = arith.addf %35, %36 : vector<8x32xf32>
    %38 = math.tanh %37 : vector<8x32xf32>
    %39 = arith.mulf %34, %38 : vector<8x32xf32>
    %40 = arith.truncf %39 : vector<8x32xf32> to vector<8x32xbf16>
    %cst_27 = arith.constant dense<0.000000e+00> : vector<8x256xf32>
    %41 = tpu.matmul %40, %8, %cst_27 {dimension_numbers = #tpu.dot_dimension_numbers<[1], [0], [0], [1], [0, 0, 1, 1], [], []>} : vector<8x32xbf16>, vector<32x256xbf16>, vector<8x256xf32> -> vector<8x256xf32>
    %42 = vector.extract_strided_slice %41 {offsets = [0, 0], sizes = [8, 128], strides = [1, 1]} : vector<8x256xf32> to vector<8x128xf32>
    %43 = vector.extract_strided_slice %41 {offsets = [0, 128], sizes = [8, 128], strides = [1, 1]} : vector<8x256xf32> to vector<8x128xf32>
    %44 = arith.truncf %15 : vector<8x32xf32> to vector<8x32xbf16>
    %cst_28 = arith.constant dense<0.000000e+00> : vector<8x128xf32>
    %45 = tpu.matmul %44, %9, %cst_28 {dimension_numbers = #tpu.dot_dimension_numbers<[1], [0], [0], [1], [0, 0, 1, 1], [], []>} : vector<8x32xbf16>, vector<32x128xbf16>, vector<8x128xf32> -> vector<8x128xf32>
    %46 = vector.extract_strided_slice %6 {offsets = [8, 0], sizes = [8, 128], strides = [1, 1]} : vector<64x128xf32> to vector<8x128xf32>
    %47 = arith.addf %46, %42 : vector<8x128xf32>
    %48 = arith.negf %47 : vector<8x128xf32>
    %49 = math.exp %48 : vector<8x128xf32>
    %cst_29 = arith.constant 1.000000e+00 : f32
    %50 = vector.broadcast %cst_29 : f32 to vector<8x128xf32>
    %51 = arith.addf %50, %49 : vector<8x128xf32>
    %52 = arith.divf %50, %51 : vector<8x128xf32>
    %53 = math.tanh %47 : vector<8x128xf32>
    %54 = vector.extract_strided_slice %52 {offsets = [0, 0], sizes = [8, 32], strides = [1, 1]} : vector<8x128xf32> to vector<8x32xf32>
    %55 = vector.extract_strided_slice %52 {offsets = [0, 32], sizes = [8, 32], strides = [1, 1]} : vector<8x128xf32> to vector<8x32xf32>
    %56 = vector.extract_strided_slice %53 {offsets = [0, 64], sizes = [8, 32], strides = [1, 1]} : vector<8x128xf32> to vector<8x32xf32>
    %57 = vector.extract_strided_slice %52 {offsets = [0, 96], sizes = [8, 32], strides = [1, 1]} : vector<8x128xf32> to vector<8x32xf32>
    %58 = arith.mulf %55, %37 : vector<8x32xf32>
    %59 = arith.mulf %54, %56 : vector<8x32xf32>
    %60 = arith.addf %58, %59 : vector<8x32xf32>
    %61 = math.tanh %60 : vector<8x32xf32>
    %62 = arith.mulf %57, %61 : vector<8x32xf32>
    %63 = arith.addf %43, %45 : vector<8x128xf32>
    %64 = vector.broadcast %11 : vector<1x128xf32> to vector<8x128xf32>
    %65 = arith.addf %63, %64 : vector<8x128xf32>
    %66 = arith.negf %65 : vector<8x128xf32>
    %67 = math.exp %66 : vector<8x128xf32>
    %cst_30 = arith.constant 1.000000e+00 : f32
    %68 = vector.broadcast %cst_30 : f32 to vector<8x128xf32>
    %69 = arith.addf %68, %67 : vector<8x128xf32>
    %70 = arith.divf %68, %69 : vector<8x128xf32>
    %71 = math.tanh %65 : vector<8x128xf32>
    %72 = vector.extract_strided_slice %70 {offsets = [0, 0], sizes = [8, 32], strides = [1, 1]} : vector<8x128xf32> to vector<8x32xf32>
    %73 = vector.extract_strided_slice %70 {offsets = [0, 32], sizes = [8, 32], strides = [1, 1]} : vector<8x128xf32> to vector<8x32xf32>
    %74 = vector.extract_strided_slice %71 {offsets = [0, 64], sizes = [8, 32], strides = [1, 1]} : vector<8x128xf32> to vector<8x32xf32>
    %75 = vector.extract_strided_slice %70 {offsets = [0, 96], sizes = [8, 32], strides = [1, 1]} : vector<8x128xf32> to vector<8x32xf32>
    %76 = arith.mulf %73, %19 : vector<8x32xf32>
    %77 = arith.mulf %72, %74 : vector<8x32xf32>
    %78 = arith.addf %76, %77 : vector<8x32xf32>
    %79 = math.tanh %78 : vector<8x32xf32>
    %80 = arith.mulf %75, %79 : vector<8x32xf32>
    %c0_31 = arith.constant 0 : index
    %c0_32 = arith.constant 0 : index
    %81 = vector.load %arg16[%c0_31, %c0_32] : memref<64x32xf32, #tpu.memory_space<vmem>>, vector<8x32xf32>
    tpu.vector_store %arg16[%c0_31, %c0_32], %80 {strides = array<i32>} : memref<64x32xf32, #tpu.memory_space<vmem>>, vector<8x32xf32>,
    %82 = arith.truncf %62 : vector<8x32xf32> to vector<8x32xbf16>
    %cst_33 = arith.constant dense<0.000000e+00> : vector<8x256xf32>
    %83 = tpu.matmul %82, %8, %cst_33 {dimension_numbers = #tpu.dot_dimension_numbers<[1], [0], [0], [1], [0, 0, 1, 1], [], []>} : vector<8x32xbf16>, vector<32x256xbf16>, vector<8x256xf32> -> vector<8x256xf32>
    %84 = vector.extract_strided_slice %83 {offsets = [0, 0], sizes = [8, 128], strides = [1, 1]} : vector<8x256xf32> to vector<8x128xf32>
    %85 = vector.extract_strided_slice %83 {offsets = [0, 128], sizes = [8, 128], strides = [1, 1]} : vector<8x256xf32> to vector<8x128xf32>
    %86 = arith.truncf %80 : vector<8x32xf32> to vector<8x32xbf16>
    %cst_34 = arith.constant dense<0.000000e+00> : vector<8x128xf32>
    %87 = tpu.matmul %86, %9, %cst_34 {dimension_numbers = #tpu.dot_dimension_numbers<[1], [0], [0], [1], [0, 0, 1, 1], [], []>} : vector<8x32xbf16>, vector<32x128xbf16>, vector<8x128xf32> -> vector<8x128xf32>
    %88 = vector.extract_strided_slice %6 {offsets = [16, 0], sizes = [8, 128], strides = [1, 1]} : vector<64x128xf32> to vector<8x128xf32>
    %89 = arith.addf %88, %84 : vector<8x128xf32>
    %90 = arith.negf %89 : vector<8x128xf32>
    %91 = math.exp %90 : vector<8x128xf32>
    %cst_35 = arith.constant 1.000000e+00 : f32
    %92 = vector.broadcast %cst_35 : f32 to vector<8x128xf32>
    %93 = arith.addf %92, %91 : vector<8x128xf32>
    %94 = arith.divf %92, %93 : vector<8x128xf32>
    %95 = math.tanh %89 : vector<8x128xf32>
    %96 = vector.extract_strided_slice %94 {offsets = [0, 0], sizes = [8, 32], strides = [1, 1]} : vector<8x128xf32> to vector<8x32xf32>
    %97 = vector.extract_strided_slice %94 {offsets = [0, 32], sizes = [8, 32], strides = [1, 1]} : vector<8x128xf32> to vector<8x32xf32>
    %98 = vector.extract_strided_slice %95 {offsets = [0, 64], sizes = [8, 32], strides = [1, 1]} : vector<8x128xf32> to vector<8x32xf32>
    %99 = vector.extract_strided_slice %94 {offsets = [0, 96], sizes = [8, 32], strides = [1, 1]} : vector<8x128xf32> to vector<8x32xf32>
    %100 = arith.mulf %97, %60 : vector<8x32xf32>
    %101 = arith.mulf %96, %98 : vector<8x32xf32>
    %102 = arith.addf %100, %101 : vector<8x32xf32>
    %103 = math.tanh %102 : vector<8x32xf32>
    %104 = arith.mulf %99, %103 : vector<8x32xf32>
    %105 = arith.addf %85, %87 : vector<8x128xf32>
    %106 = vector.broadcast %11 : vector<1x128xf32> to vector<8x128xf32>
    %107 = arith.addf %105, %106 : vector<8x128xf32>
    %108 = arith.negf %107 : vector<8x128xf32>
    %109 = math.exp %108 : vector<8x128xf32>
    %cst_36 = arith.constant 1.000000e+00 : f32
    %110 = vector.broadcast %cst_36 : f32 to vector<8x128xf32>
    %111 = arith.addf %110, %109 : vector<8x128xf32>
    %112 = arith.divf %110, %111 : vector<8x128xf32>
    %113 = math.tanh %107 : vector<8x128xf32>
    %114 = vector.extract_strided_slice %112 {offsets = [0, 0], sizes = [8, 32], strides = [1, 1]} : vector<8x128xf32> to vector<8x32xf32>
    %115 = vector.extract_strided_slice %112 {offsets = [0, 32], sizes = [8, 32], strides = [1, 1]} : vector<8x128xf32> to vector<8x32xf32>
    %116 = vector.extract_strided_slice %113 {offsets = [0, 64], sizes = [8, 32], strides = [1, 1]} : vector<8x128xf32> to vector<8x32xf32>
    %117 = vector.extract_strided_slice %112 {offsets = [0, 96], sizes = [8, 32], strides = [1, 1]} : vector<8x128xf32> to vector<8x32xf32>
    %118 = arith.mulf %115, %78 : vector<8x32xf32>
    %119 = arith.mulf %114, %116 : vector<8x32xf32>
    %120 = arith.addf %118, %119 : vector<8x32xf32>
    %121 = math.tanh %120 : vector<8x32xf32>
    %122 = arith.mulf %117, %121 : vector<8x32xf32>
    %c8 = arith.constant 8 : index
    %c0_37 = arith.constant 0 : index
    %123 = vector.load %arg16[%c8, %c0_37] : memref<64x32xf32, #tpu.memory_space<vmem>>, vector<8x32xf32>
    tpu.vector_store %arg16[%c8, %c0_37], %122 {strides = array<i32>} : memref<64x32xf32, #tpu.memory_space<vmem>>, vector<8x32xf32>,
    %124 = arith.truncf %104 : vector<8x32xf32> to vector<8x32xbf16>
    %cst_38 = arith.constant dense<0.000000e+00> : vector<8x256xf32>
    %125 = tpu.matmul %124, %8, %cst_38 {dimension_numbers = #tpu.dot_dimension_numbers<[1], [0], [0], [1], [0, 0, 1, 1], [], []>} : vector<8x32xbf16>, vector<32x256xbf16>, vector<8x256xf32> -> vector<8x256xf32>
    %126 = vector.extract_strided_slice %125 {offsets = [0, 0], sizes = [8, 128], strides = [1, 1]} : vector<8x256xf32> to vector<8x128xf32>
    %127 = vector.extract_strided_slice %125 {offsets = [0, 128], sizes = [8, 128], strides = [1, 1]} : vector<8x256xf32> to vector<8x128xf32>
    %128 = arith.truncf %122 : vector<8x32xf32> to vector<8x32xbf16>
    %cst_39 = arith.constant dense<0.000000e+00> : vector<8x128xf32>
    %129 = tpu.matmul %128, %9, %cst_39 {dimension_numbers = #tpu.dot_dimension_numbers<[1], [0], [0], [1], [0, 0, 1, 1], [], []>} : vector<8x32xbf16>, vector<32x128xbf16>, vector<8x128xf32> -> vector<8x128xf32>
    %130 = vector.extract_strided_slice %6 {offsets = [24, 0], sizes = [8, 128], strides = [1, 1]} : vector<64x128xf32> to vector<8x128xf32>
    %131 = arith.addf %130, %126 : vector<8x128xf32>
    %132 = arith.negf %131 : vector<8x128xf32>
    %133 = math.exp %132 : vector<8x128xf32>
    %cst_40 = arith.constant 1.000000e+00 : f32
    %134 = vector.broadcast %cst_40 : f32 to vector<8x128xf32>
    %135 = arith.addf %134, %133 : vector<8x128xf32>
    %136 = arith.divf %134, %135 : vector<8x128xf32>
    %137 = math.tanh %131 : vector<8x128xf32>
    %138 = vector.extract_strided_slice %136 {offsets = [0, 0], sizes = [8, 32], strides = [1, 1]} : vector<8x128xf32> to vector<8x32xf32>
    %139 = vector.extract_strided_slice %136 {offsets = [0, 32], sizes = [8, 32], strides = [1, 1]} : vector<8x128xf32> to vector<8x32xf32>
    %140 = vector.extract_strided_slice %137 {offsets = [0, 64], sizes = [8, 32], strides = [1, 1]} : vector<8x128xf32> to vector<8x32xf32>
    %141 = vector.extract_strided_slice %136 {offsets = [0, 96], sizes = [8, 32], strides = [1, 1]} : vector<8x128xf32> to vector<8x32xf32>
    %142 = arith.mulf %139, %102 : vector<8x32xf32>
    %143 = arith.mulf %138, %140 : vector<8x32xf32>
    %144 = arith.addf %142, %143 : vector<8x32xf32>
    %145 = math.tanh %144 : vector<8x32xf32>
    %146 = arith.mulf %141, %145 : vector<8x32xf32>
    %147 = arith.addf %127, %129 : vector<8x128xf32>
    %148 = vector.broadcast %11 : vector<1x128xf32> to vector<8x128xf32>
    %149 = arith.addf %147, %148 : vector<8x128xf32>
    %150 = arith.negf %149 : vector<8x128xf32>
    %151 = math.exp %150 : vector<8x128xf32>
    %cst_41 = arith.constant 1.000000e+00 : f32
    %152 = vector.broadcast %cst_41 : f32 to vector<8x128xf32>
    %153 = arith.addf %152, %151 : vector<8x128xf32>
    %154 = arith.divf %152, %153 : vector<8x128xf32>
    %155 = math.tanh %149 : vector<8x128xf32>
    %156 = vector.extract_strided_slice %154 {offsets = [0, 0], sizes = [8, 32], strides = [1, 1]} : vector<8x128xf32> to vector<8x32xf32>
    %157 = vector.extract_strided_slice %154 {offsets = [0, 32], sizes = [8, 32], strides = [1, 1]} : vector<8x128xf32> to vector<8x32xf32>
    %158 = vector.extract_strided_slice %155 {offsets = [0, 64], sizes = [8, 32], strides = [1, 1]} : vector<8x128xf32> to vector<8x32xf32>
    %159 = vector.extract_strided_slice %154 {offsets = [0, 96], sizes = [8, 32], strides = [1, 1]} : vector<8x128xf32> to vector<8x32xf32>
    %160 = arith.mulf %157, %120 : vector<8x32xf32>
    %161 = arith.mulf %156, %158 : vector<8x32xf32>
    %162 = arith.addf %160, %161 : vector<8x32xf32>
    %163 = math.tanh %162 : vector<8x32xf32>
    %164 = arith.mulf %159, %163 : vector<8x32xf32>
    %c16 = arith.constant 16 : index
    %c0_42 = arith.constant 0 : index
    %165 = vector.load %arg16[%c16, %c0_42] : memref<64x32xf32, #tpu.memory_space<vmem>>, vector<8x32xf32>
    tpu.vector_store %arg16[%c16, %c0_42], %164 {strides = array<i32>} : memref<64x32xf32, #tpu.memory_space<vmem>>, vector<8x32xf32>,
    %166 = arith.truncf %146 : vector<8x32xf32> to vector<8x32xbf16>
    %cst_43 = arith.constant dense<0.000000e+00> : vector<8x256xf32>
    %167 = tpu.matmul %166, %8, %cst_43 {dimension_numbers = #tpu.dot_dimension_numbers<[1], [0], [0], [1], [0, 0, 1, 1], [], []>} : vector<8x32xbf16>, vector<32x256xbf16>, vector<8x256xf32> -> vector<8x256xf32>
    %168 = vector.extract_strided_slice %167 {offsets = [0, 0], sizes = [8, 128], strides = [1, 1]} : vector<8x256xf32> to vector<8x128xf32>
    %169 = vector.extract_strided_slice %167 {offsets = [0, 128], sizes = [8, 128], strides = [1, 1]} : vector<8x256xf32> to vector<8x128xf32>
    %170 = arith.truncf %164 : vector<8x32xf32> to vector<8x32xbf16>
    %cst_44 = arith.constant dense<0.000000e+00> : vector<8x128xf32>
    %171 = tpu.matmul %170, %9, %cst_44 {dimension_numbers = #tpu.dot_dimension_numbers<[1], [0], [0], [1], [0, 0, 1, 1], [], []>} : vector<8x32xbf16>, vector<32x128xbf16>, vector<8x128xf32> -> vector<8x128xf32>
    %172 = vector.extract_strided_slice %6 {offsets = [32, 0], sizes = [8, 128], strides = [1, 1]} : vector<64x128xf32> to vector<8x128xf32>
    %173 = arith.addf %172, %168 : vector<8x128xf32>
    %174 = arith.negf %173 : vector<8x128xf32>
    %175 = math.exp %174 : vector<8x128xf32>
    %cst_45 = arith.constant 1.000000e+00 : f32
    %176 = vector.broadcast %cst_45 : f32 to vector<8x128xf32>
    %177 = arith.addf %176, %175 : vector<8x128xf32>
    %178 = arith.divf %176, %177 : vector<8x128xf32>
    %179 = math.tanh %173 : vector<8x128xf32>
    %180 = vector.extract_strided_slice %178 {offsets = [0, 0], sizes = [8, 32], strides = [1, 1]} : vector<8x128xf32> to vector<8x32xf32>
    %181 = vector.extract_strided_slice %178 {offsets = [0, 32], sizes = [8, 32], strides = [1, 1]} : vector<8x128xf32> to vector<8x32xf32>
    %182 = vector.extract_strided_slice %179 {offsets = [0, 64], sizes = [8, 32], strides = [1, 1]} : vector<8x128xf32> to vector<8x32xf32>
    %183 = vector.extract_strided_slice %178 {offsets = [0, 96], sizes = [8, 32], strides = [1, 1]} : vector<8x128xf32> to vector<8x32xf32>
    %184 = arith.mulf %181, %144 : vector<8x32xf32>
    %185 = arith.mulf %180, %182 : vector<8x32xf32>
    %186 = arith.addf %184, %185 : vector<8x32xf32>
    %187 = math.tanh %186 : vector<8x32xf32>
    %188 = arith.mulf %183, %187 : vector<8x32xf32>
    %189 = arith.addf %169, %171 : vector<8x128xf32>
    %190 = vector.broadcast %11 : vector<1x128xf32> to vector<8x128xf32>
    %191 = arith.addf %189, %190 : vector<8x128xf32>
    %192 = arith.negf %191 : vector<8x128xf32>
    %193 = math.exp %192 : vector<8x128xf32>
    %cst_46 = arith.constant 1.000000e+00 : f32
    %194 = vector.broadcast %cst_46 : f32 to vector<8x128xf32>
    %195 = arith.addf %194, %193 : vector<8x128xf32>
    %196 = arith.divf %194, %195 : vector<8x128xf32>
    %197 = math.tanh %191 : vector<8x128xf32>
    %198 = vector.extract_strided_slice %196 {offsets = [0, 0], sizes = [8, 32], strides = [1, 1]} : vector<8x128xf32> to vector<8x32xf32>
    %199 = vector.extract_strided_slice %196 {offsets = [0, 32], sizes = [8, 32], strides = [1, 1]} : vector<8x128xf32> to vector<8x32xf32>
    %200 = vector.extract_strided_slice %197 {offsets = [0, 64], sizes = [8, 32], strides = [1, 1]} : vector<8x128xf32> to vector<8x32xf32>
    %201 = vector.extract_strided_slice %196 {offsets = [0, 96], sizes = [8, 32], strides = [1, 1]} : vector<8x128xf32> to vector<8x32xf32>
    %202 = arith.mulf %199, %162 : vector<8x32xf32>
    %203 = arith.mulf %198, %200 : vector<8x32xf32>
    %204 = arith.addf %202, %203 : vector<8x32xf32>
    %205 = math.tanh %204 : vector<8x32xf32>
    %206 = arith.mulf %201, %205 : vector<8x32xf32>
    %c24 = arith.constant 24 : index
    %c0_47 = arith.constant 0 : index
    %207 = vector.load %arg16[%c24, %c0_47] : memref<64x32xf32, #tpu.memory_space<vmem>>, vector<8x32xf32>
    tpu.vector_store %arg16[%c24, %c0_47], %206 {strides = array<i32>} : memref<64x32xf32, #tpu.memory_space<vmem>>, vector<8x32xf32>,
    %208 = arith.truncf %188 : vector<8x32xf32> to vector<8x32xbf16>
    %cst_48 = arith.constant dense<0.000000e+00> : vector<8x256xf32>
    %209 = tpu.matmul %208, %8, %cst_48 {dimension_numbers = #tpu.dot_dimension_numbers<[1], [0], [0], [1], [0, 0, 1, 1], [], []>} : vector<8x32xbf16>, vector<32x256xbf16>, vector<8x256xf32> -> vector<8x256xf32>
    %210 = vector.extract_strided_slice %209 {offsets = [0, 0], sizes = [8, 128], strides = [1, 1]} : vector<8x256xf32> to vector<8x128xf32>
    %211 = vector.extract_strided_slice %209 {offsets = [0, 128], sizes = [8, 128], strides = [1, 1]} : vector<8x256xf32> to vector<8x128xf32>
    %212 = arith.truncf %206 : vector<8x32xf32> to vector<8x32xbf16>
    %cst_49 = arith.constant dense<0.000000e+00> : vector<8x128xf32>
    %213 = tpu.matmul %212, %9, %cst_49 {dimension_numbers = #tpu.dot_dimension_numbers<[1], [0], [0], [1], [0, 0, 1, 1], [], []>} : vector<8x32xbf16>, vector<32x128xbf16>, vector<8x128xf32> -> vector<8x128xf32>
    %214 = vector.extract_strided_slice %6 {offsets = [40, 0], sizes = [8, 128], strides = [1, 1]} : vector<64x128xf32> to vector<8x128xf32>
    %215 = arith.addf %214, %210 : vector<8x128xf32>
    %216 = arith.negf %215 : vector<8x128xf32>
    %217 = math.exp %216 : vector<8x128xf32>
    %cst_50 = arith.constant 1.000000e+00 : f32
    %218 = vector.broadcast %cst_50 : f32 to vector<8x128xf32>
    %219 = arith.addf %218, %217 : vector<8x128xf32>
    %220 = arith.divf %218, %219 : vector<8x128xf32>
    %221 = math.tanh %215 : vector<8x128xf32>
    %222 = vector.extract_strided_slice %220 {offsets = [0, 0], sizes = [8, 32], strides = [1, 1]} : vector<8x128xf32> to vector<8x32xf32>
    %223 = vector.extract_strided_slice %220 {offsets = [0, 32], sizes = [8, 32], strides = [1, 1]} : vector<8x128xf32> to vector<8x32xf32>
    %224 = vector.extract_strided_slice %221 {offsets = [0, 64], sizes = [8, 32], strides = [1, 1]} : vector<8x128xf32> to vector<8x32xf32>
    %225 = vector.extract_strided_slice %220 {offsets = [0, 96], sizes = [8, 32], strides = [1, 1]} : vector<8x128xf32> to vector<8x32xf32>
    %226 = arith.mulf %223, %186 : vector<8x32xf32>
    %227 = arith.mulf %222, %224 : vector<8x32xf32>
    %228 = arith.addf %226, %227 : vector<8x32xf32>
    %229 = math.tanh %228 : vector<8x32xf32>
    %230 = arith.mulf %225, %229 : vector<8x32xf32>
    %231 = arith.addf %211, %213 : vector<8x128xf32>
    %232 = vector.broadcast %11 : vector<1x128xf32> to vector<8x128xf32>
    %233 = arith.addf %231, %232 : vector<8x128xf32>
    %234 = arith.negf %233 : vector<8x128xf32>
    %235 = math.exp %234 : vector<8x128xf32>
    %cst_51 = arith.constant 1.000000e+00 : f32
    %236 = vector.broadcast %cst_51 : f32 to vector<8x128xf32>
    %237 = arith.addf %236, %235 : vector<8x128xf32>
    %238 = arith.divf %236, %237 : vector<8x128xf32>
    %239 = math.tanh %233 : vector<8x128xf32>
    %240 = vector.extract_strided_slice %238 {offsets = [0, 0], sizes = [8, 32], strides = [1, 1]} : vector<8x128xf32> to vector<8x32xf32>
    %241 = vector.extract_strided_slice %238 {offsets = [0, 32], sizes = [8, 32], strides = [1, 1]} : vector<8x128xf32> to vector<8x32xf32>
    %242 = vector.extract_strided_slice %239 {offsets = [0, 64], sizes = [8, 32], strides = [1, 1]} : vector<8x128xf32> to vector<8x32xf32>
    %243 = vector.extract_strided_slice %238 {offsets = [0, 96], sizes = [8, 32], strides = [1, 1]} : vector<8x128xf32> to vector<8x32xf32>
    %244 = arith.mulf %241, %204 : vector<8x32xf32>
    %245 = arith.mulf %240, %242 : vector<8x32xf32>
    %246 = arith.addf %244, %245 : vector<8x32xf32>
    %247 = math.tanh %246 : vector<8x32xf32>
    %248 = arith.mulf %243, %247 : vector<8x32xf32>
    %c32 = arith.constant 32 : index
    %c0_52 = arith.constant 0 : index
    %249 = vector.load %arg16[%c32, %c0_52] : memref<64x32xf32, #tpu.memory_space<vmem>>, vector<8x32xf32>
    tpu.vector_store %arg16[%c32, %c0_52], %248 {strides = array<i32>} : memref<64x32xf32, #tpu.memory_space<vmem>>, vector<8x32xf32>,
    %250 = arith.truncf %230 : vector<8x32xf32> to vector<8x32xbf16>
    %cst_53 = arith.constant dense<0.000000e+00> : vector<8x256xf32>
    %251 = tpu.matmul %250, %8, %cst_53 {dimension_numbers = #tpu.dot_dimension_numbers<[1], [0], [0], [1], [0, 0, 1, 1], [], []>} : vector<8x32xbf16>, vector<32x256xbf16>, vector<8x256xf32> -> vector<8x256xf32>
    %252 = vector.extract_strided_slice %251 {offsets = [0, 0], sizes = [8, 128], strides = [1, 1]} : vector<8x256xf32> to vector<8x128xf32>
    %253 = vector.extract_strided_slice %251 {offsets = [0, 128], sizes = [8, 128], strides = [1, 1]} : vector<8x256xf32> to vector<8x128xf32>
    %254 = arith.truncf %248 : vector<8x32xf32> to vector<8x32xbf16>
    %cst_54 = arith.constant dense<0.000000e+00> : vector<8x128xf32>
    %255 = tpu.matmul %254, %9, %cst_54 {dimension_numbers = #tpu.dot_dimension_numbers<[1], [0], [0], [1], [0, 0, 1, 1], [], []>} : vector<8x32xbf16>, vector<32x128xbf16>, vector<8x128xf32> -> vector<8x128xf32>
    %256 = vector.extract_strided_slice %6 {offsets = [48, 0], sizes = [8, 128], strides = [1, 1]} : vector<64x128xf32> to vector<8x128xf32>
    %257 = arith.addf %256, %252 : vector<8x128xf32>
    %258 = arith.negf %257 : vector<8x128xf32>
    %259 = math.exp %258 : vector<8x128xf32>
    %cst_55 = arith.constant 1.000000e+00 : f32
    %260 = vector.broadcast %cst_55 : f32 to vector<8x128xf32>
    %261 = arith.addf %260, %259 : vector<8x128xf32>
    %262 = arith.divf %260, %261 : vector<8x128xf32>
    %263 = math.tanh %257 : vector<8x128xf32>
    %264 = vector.extract_strided_slice %262 {offsets = [0, 0], sizes = [8, 32], strides = [1, 1]} : vector<8x128xf32> to vector<8x32xf32>
    %265 = vector.extract_strided_slice %262 {offsets = [0, 32], sizes = [8, 32], strides = [1, 1]} : vector<8x128xf32> to vector<8x32xf32>
    %266 = vector.extract_strided_slice %263 {offsets = [0, 64], sizes = [8, 32], strides = [1, 1]} : vector<8x128xf32> to vector<8x32xf32>
    %267 = vector.extract_strided_slice %262 {offsets = [0, 96], sizes = [8, 32], strides = [1, 1]} : vector<8x128xf32> to vector<8x32xf32>
    %268 = arith.mulf %265, %228 : vector<8x32xf32>
    %269 = arith.mulf %264, %266 : vector<8x32xf32>
    %270 = arith.addf %268, %269 : vector<8x32xf32>
    %271 = math.tanh %270 : vector<8x32xf32>
    %272 = arith.mulf %267, %271 : vector<8x32xf32>
    %273 = arith.addf %253, %255 : vector<8x128xf32>
    %274 = vector.broadcast %11 : vector<1x128xf32> to vector<8x128xf32>
    %275 = arith.addf %273, %274 : vector<8x128xf32>
    %276 = arith.negf %275 : vector<8x128xf32>
    %277 = math.exp %276 : vector<8x128xf32>
    %cst_56 = arith.constant 1.000000e+00 : f32
    %278 = vector.broadcast %cst_56 : f32 to vector<8x128xf32>
    %279 = arith.addf %278, %277 : vector<8x128xf32>
    %280 = arith.divf %278, %279 : vector<8x128xf32>
    %281 = math.tanh %275 : vector<8x128xf32>
    %282 = vector.extract_strided_slice %280 {offsets = [0, 0], sizes = [8, 32], strides = [1, 1]} : vector<8x128xf32> to vector<8x32xf32>
    %283 = vector.extract_strided_slice %280 {offsets = [0, 32], sizes = [8, 32], strides = [1, 1]} : vector<8x128xf32> to vector<8x32xf32>
    %284 = vector.extract_strided_slice %281 {offsets = [0, 64], sizes = [8, 32], strides = [1, 1]} : vector<8x128xf32> to vector<8x32xf32>
    %285 = vector.extract_strided_slice %280 {offsets = [0, 96], sizes = [8, 32], strides = [1, 1]} : vector<8x128xf32> to vector<8x32xf32>
    %286 = arith.mulf %283, %246 : vector<8x32xf32>
    %287 = arith.mulf %282, %284 : vector<8x32xf32>
    %288 = arith.addf %286, %287 : vector<8x32xf32>
    %289 = math.tanh %288 : vector<8x32xf32>
    %290 = arith.mulf %285, %289 : vector<8x32xf32>
    %c40 = arith.constant 40 : index
    %c0_57 = arith.constant 0 : index
    %291 = vector.load %arg16[%c40, %c0_57] : memref<64x32xf32, #tpu.memory_space<vmem>>, vector<8x32xf32>
    tpu.vector_store %arg16[%c40, %c0_57], %290 {strides = array<i32>} : memref<64x32xf32, #tpu.memory_space<vmem>>, vector<8x32xf32>,
    %292 = arith.truncf %272 : vector<8x32xf32> to vector<8x32xbf16>
    %cst_58 = arith.constant dense<0.000000e+00> : vector<8x256xf32>
    %293 = tpu.matmul %292, %8, %cst_58 {dimension_numbers = #tpu.dot_dimension_numbers<[1], [0], [0], [1], [0, 0, 1, 1], [], []>} : vector<8x32xbf16>, vector<32x256xbf16>, vector<8x256xf32> -> vector<8x256xf32>
    %294 = vector.extract_strided_slice %293 {offsets = [0, 0], sizes = [8, 128], strides = [1, 1]} : vector<8x256xf32> to vector<8x128xf32>
    %295 = vector.extract_strided_slice %293 {offsets = [0, 128], sizes = [8, 128], strides = [1, 1]} : vector<8x256xf32> to vector<8x128xf32>
    %296 = arith.truncf %290 : vector<8x32xf32> to vector<8x32xbf16>
    %cst_59 = arith.constant dense<0.000000e+00> : vector<8x128xf32>
    %297 = tpu.matmul %296, %9, %cst_59 {dimension_numbers = #tpu.dot_dimension_numbers<[1], [0], [0], [1], [0, 0, 1, 1], [], []>} : vector<8x32xbf16>, vector<32x128xbf16>, vector<8x128xf32> -> vector<8x128xf32>
    %298 = vector.extract_strided_slice %6 {offsets = [56, 0], sizes = [8, 128], strides = [1, 1]} : vector<64x128xf32> to vector<8x128xf32>
    %299 = arith.addf %298, %294 : vector<8x128xf32>
    %300 = arith.negf %299 : vector<8x128xf32>
    %301 = math.exp %300 : vector<8x128xf32>
    %cst_60 = arith.constant 1.000000e+00 : f32
    %302 = vector.broadcast %cst_60 : f32 to vector<8x128xf32>
    %303 = arith.addf %302, %301 : vector<8x128xf32>
    %304 = arith.divf %302, %303 : vector<8x128xf32>
    %305 = math.tanh %299 : vector<8x128xf32>
    %306 = vector.extract_strided_slice %304 {offsets = [0, 0], sizes = [8, 32], strides = [1, 1]} : vector<8x128xf32> to vector<8x32xf32>
    %307 = vector.extract_strided_slice %304 {offsets = [0, 32], sizes = [8, 32], strides = [1, 1]} : vector<8x128xf32> to vector<8x32xf32>
    %308 = vector.extract_strided_slice %305 {offsets = [0, 64], sizes = [8, 32], strides = [1, 1]} : vector<8x128xf32> to vector<8x32xf32>
    %309 = vector.extract_strided_slice %304 {offsets = [0, 96], sizes = [8, 32], strides = [1, 1]} : vector<8x128xf32> to vector<8x32xf32>
    %310 = arith.mulf %307, %270 : vector<8x32xf32>
    %311 = arith.mulf %306, %308 : vector<8x32xf32>
    %312 = arith.addf %310, %311 : vector<8x32xf32>
    %313 = math.tanh %312 : vector<8x32xf32>
    %314 = arith.mulf %309, %313 : vector<8x32xf32>
    %315 = arith.addf %295, %297 : vector<8x128xf32>
    %316 = vector.broadcast %11 : vector<1x128xf32> to vector<8x128xf32>
    %317 = arith.addf %315, %316 : vector<8x128xf32>
    %318 = arith.negf %317 : vector<8x128xf32>
    %319 = math.exp %318 : vector<8x128xf32>
    %cst_61 = arith.constant 1.000000e+00 : f32
    %320 = vector.broadcast %cst_61 : f32 to vector<8x128xf32>
    %321 = arith.addf %320, %319 : vector<8x128xf32>
    %322 = arith.divf %320, %321 : vector<8x128xf32>
    %323 = math.tanh %317 : vector<8x128xf32>
    %324 = vector.extract_strided_slice %322 {offsets = [0, 0], sizes = [8, 32], strides = [1, 1]} : vector<8x128xf32> to vector<8x32xf32>
    %325 = vector.extract_strided_slice %322 {offsets = [0, 32], sizes = [8, 32], strides = [1, 1]} : vector<8x128xf32> to vector<8x32xf32>
    %326 = vector.extract_strided_slice %323 {offsets = [0, 64], sizes = [8, 32], strides = [1, 1]} : vector<8x128xf32> to vector<8x32xf32>
    %327 = vector.extract_strided_slice %322 {offsets = [0, 96], sizes = [8, 32], strides = [1, 1]} : vector<8x128xf32> to vector<8x32xf32>
    %328 = arith.mulf %325, %288 : vector<8x32xf32>
    %329 = arith.mulf %324, %326 : vector<8x32xf32>
    %330 = arith.addf %328, %329 : vector<8x32xf32>
    %331 = math.tanh %330 : vector<8x32xf32>
    %332 = arith.mulf %327, %331 : vector<8x32xf32>
    %c48 = arith.constant 48 : index
    %c0_62 = arith.constant 0 : index
    %333 = vector.load %arg16[%c48, %c0_62] : memref<64x32xf32, #tpu.memory_space<vmem>>, vector<8x32xf32>
    tpu.vector_store %arg16[%c48, %c0_62], %332 {strides = array<i32>} : memref<64x32xf32, #tpu.memory_space<vmem>>, vector<8x32xf32>,
    %334 = arith.truncf %314 : vector<8x32xf32> to vector<8x32xbf16>
    %cst_63 = arith.constant dense<0.000000e+00> : vector<8x256xf32>
    %335 = tpu.matmul %334, %8, %cst_63 {dimension_numbers = #tpu.dot_dimension_numbers<[1], [0], [0], [1], [0, 0, 1, 1], [], []>} : vector<8x32xbf16>, vector<32x256xbf16>, vector<8x256xf32> -> vector<8x256xf32>
    %336 = vector.extract_strided_slice %335 {offsets = [0, 128], sizes = [8, 128], strides = [1, 1]} : vector<8x256xf32> to vector<8x128xf32>
    %337 = arith.truncf %332 : vector<8x32xf32> to vector<8x32xbf16>
    %cst_64 = arith.constant dense<0.000000e+00> : vector<8x128xf32>
    %338 = tpu.matmul %337, %9, %cst_64 {dimension_numbers = #tpu.dot_dimension_numbers<[1], [0], [0], [1], [0, 0, 1, 1], [], []>} : vector<8x32xbf16>, vector<32x128xbf16>, vector<8x128xf32> -> vector<8x128xf32>
    %339 = arith.addf %336, %338 : vector<8x128xf32>
    %340 = vector.broadcast %11 : vector<1x128xf32> to vector<8x128xf32>
    %341 = arith.addf %339, %340 : vector<8x128xf32>
    %342 = arith.negf %341 : vector<8x128xf32>
    %343 = math.exp %342 : vector<8x128xf32>
    %cst_65 = arith.constant 1.000000e+00 : f32
    %344 = vector.broadcast %cst_65 : f32 to vector<8x128xf32>
    %345 = arith.addf %344, %343 : vector<8x128xf32>
    %346 = arith.divf %344, %345 : vector<8x128xf32>
    %347 = math.tanh %341 : vector<8x128xf32>
    %348 = vector.extract_strided_slice %346 {offsets = [0, 0], sizes = [8, 32], strides = [1, 1]} : vector<8x128xf32> to vector<8x32xf32>
    %349 = vector.extract_strided_slice %346 {offsets = [0, 32], sizes = [8, 32], strides = [1, 1]} : vector<8x128xf32> to vector<8x32xf32>
    %350 = vector.extract_strided_slice %347 {offsets = [0, 64], sizes = [8, 32], strides = [1, 1]} : vector<8x128xf32> to vector<8x32xf32>
    %351 = vector.extract_strided_slice %346 {offsets = [0, 96], sizes = [8, 32], strides = [1, 1]} : vector<8x128xf32> to vector<8x32xf32>
    %352 = arith.mulf %349, %330 : vector<8x32xf32>
    %353 = arith.mulf %348, %350 : vector<8x32xf32>
    %354 = arith.addf %352, %353 : vector<8x32xf32>
    %355 = math.tanh %354 : vector<8x32xf32>
    %356 = arith.mulf %351, %355 : vector<8x32xf32>
    %c56 = arith.constant 56 : index
    %c0_66 = arith.constant 0 : index
    %357 = vector.load %arg16[%c56, %c0_66] : memref<64x32xf32, #tpu.memory_space<vmem>>, vector<8x32xf32>
    tpu.vector_store %arg16[%c56, %c0_66], %356 {strides = array<i32>} : memref<64x32xf32, #tpu.memory_space<vmem>>, vector<8x32xf32>,
    %c0_67 = arith.constant 0 : index
    %c0_68 = arith.constant 0 : index
    %c0_69 = arith.constant 0 : index
    %358 = vector.load %arg14[%c0_67, %c0_68, %c0_69] : memref<2x8x32xf32, #tpu.memory_space<vmem>>, vector<1x8x32xf32>
    %359 = vector.shape_cast %358 : vector<1x8x32xf32> to vector<8x32xf32>
    %360 = vector.shape_cast %314 : vector<8x32xf32> to vector<1x8x32xf32>
    tpu.vector_store %arg14[%c0_67, %c0_68, %c0_69], %360 {strides = array<i32>} : memref<2x8x32xf32, #tpu.memory_space<vmem>>, vector<1x8x32xf32>,
    %c0_70 = arith.constant 0 : index
    %c0_71 = arith.constant 0 : index
    %c0_72 = arith.constant 0 : index
    %361 = vector.load %arg15[%c0_70, %c0_71, %c0_72] : memref<2x8x32xf32, #tpu.memory_space<vmem>>, vector<1x8x32xf32>
    %362 = vector.shape_cast %361 : vector<1x8x32xf32> to vector<8x32xf32>
    %363 = vector.shape_cast %312 : vector<8x32xf32> to vector<1x8x32xf32>
    tpu.vector_store %arg15[%c0_70, %c0_71, %c0_72], %363 {strides = array<i32>} : memref<2x8x32xf32, #tpu.memory_space<vmem>>, vector<1x8x32xf32>,
    %c1_73 = arith.constant 1 : index
    %c0_74 = arith.constant 0 : index
    %c0_75 = arith.constant 0 : index
    %364 = vector.load %arg14[%c1_73, %c0_74, %c0_75] : memref<2x8x32xf32, #tpu.memory_space<vmem>>, vector<1x8x32xf32>
    %365 = vector.shape_cast %364 : vector<1x8x32xf32> to vector<8x32xf32>
    %366 = vector.shape_cast %356 : vector<8x32xf32> to vector<1x8x32xf32>
    tpu.vector_store %arg14[%c1_73, %c0_74, %c0_75], %366 {strides = array<i32>} : memref<2x8x32xf32, #tpu.memory_space<vmem>>, vector<1x8x32xf32>,
    %c1_76 = arith.constant 1 : index
    %c0_77 = arith.constant 0 : index
    %c0_78 = arith.constant 0 : index
    %367 = vector.load %arg15[%c1_76, %c0_77, %c0_78] : memref<2x8x32xf32, #tpu.memory_space<vmem>>, vector<1x8x32xf32>
    %368 = vector.shape_cast %367 : vector<1x8x32xf32> to vector<8x32xf32>
    %369 = vector.shape_cast %354 : vector<8x32xf32> to vector<1x8x32xf32>
    tpu.vector_store %arg15[%c1_76, %c0_77, %c0_78], %369 {strides = array<i32>} : memref<2x8x32xf32, #tpu.memory_space<vmem>>, vector<1x8x32xf32>,
    %c0_79 = arith.constant 0 : index
    %c0_80 = arith.constant 0 : index
    %370 = vector.load %arg16[%c0_79, %c0_80] : memref<64x32xf32, #tpu.memory_space<vmem>>, vector<64x32xf32>
    %c0_81 = arith.constant 0 : index
    %c0_82 = arith.constant 0 : index
    %371 = vector.load %arg7[%c0_81, %c0_82] : memref<32x32xbf16, #tpu.memory_space<vmem>>, vector<32x32xbf16>
    %372 = arith.truncf %370 : vector<64x32xf32> to vector<64x32xbf16>
    %cst_83 = arith.constant dense<0.000000e+00> : vector<64x32xf32>
    %373 = tpu.matmul %372, %371, %cst_83 {dimension_numbers = #tpu.dot_dimension_numbers<[1], [0], [0], [1], [0, 0, 1, 1], [], []>} : vector<64x32xbf16>, vector<32x32xbf16>, vector<64x32xf32> -> vector<64x32xf32>
    %c0_84 = arith.constant 0 : index
    %c0_85 = arith.constant 0 : index
    %374 = vector.load %arg8[%c0_84, %c0_85] : memref<1x32xf32, #tpu.memory_space<vmem>>, vector<1x32xf32>
    %375 = vector.broadcast %374 : vector<1x32xf32> to vector<64x32xf32>
    %376 = arith.addf %373, %375 : vector<64x32xf32>
    %cst_86 = arith.constant 0.000000e+00 : f32
    %377 = vector.broadcast %cst_86 : f32 to vector<64x32xf32>
    %378 = arith.maximumf %376, %377 : vector<64x32xf32>
    %c0_87 = arith.constant 0 : index
    %c0_88 = arith.constant 0 : index
    %379 = vector.load %arg9[%c0_87, %c0_88] : memref<32x32xbf16, #tpu.memory_space<vmem>>, vector<32x32xbf16>
    %380 = arith.truncf %378 : vector<64x32xf32> to vector<64x32xbf16>
    %cst_89 = arith.constant dense<0.000000e+00> : vector<64x32xf32>
    %381 = tpu.matmul %380, %379, %cst_89 {dimension_numbers = #tpu.dot_dimension_numbers<[1], [0], [0], [1], [0, 0, 1, 1], [], []>} : vector<64x32xbf16>, vector<32x32xbf16>, vector<64x32xf32> -> vector<64x32xf32>
    %c0_90 = arith.constant 0 : index
    %c0_91 = arith.constant 0 : index
    %382 = vector.load %arg10[%c0_90, %c0_91] : memref<1x32xf32, #tpu.memory_space<vmem>>, vector<1x32xf32>
    %383 = vector.broadcast %382 : vector<1x32xf32> to vector<64x32xf32>
    %384 = arith.addf %381, %383 : vector<64x32xf32>
    %cst_92 = arith.constant 0.000000e+00 : f32
    %385 = vector.broadcast %cst_92 : f32 to vector<64x32xf32>
    %386 = arith.maximumf %384, %385 : vector<64x32xf32>
    %c0_93 = arith.constant 0 : index
    %c0_94 = arith.constant 0 : index
    %387 = vector.load %arg11[%c0_93, %c0_94] : memref<32x8xbf16, #tpu.memory_space<vmem>>, vector<32x8xbf16>
    %388 = arith.truncf %386 : vector<64x32xf32> to vector<64x32xbf16>
    %cst_95 = arith.constant dense<0.000000e+00> : vector<64x8xf32>
    %389 = tpu.matmul %388, %387, %cst_95 {dimension_numbers = #tpu.dot_dimension_numbers<[1], [0], [0], [1], [0, 0, 1, 1], [], []>} : vector<64x32xbf16>, vector<32x8xbf16>, vector<64x8xf32> -> vector<64x8xf32>
    %c0_96 = arith.constant 0 : index
    %c0_97 = arith.constant 0 : index
    %390 = vector.load %arg12[%c0_96, %c0_97] : memref<1x8xf32, #tpu.memory_space<vmem>>, vector<1x8xf32>
    %391 = vector.broadcast %390 : vector<1x8xf32> to vector<64x8xf32>
    %392 = arith.addf %389, %391 : vector<64x8xf32>
    %393 = tpu.iota {dimensions = array<i32: 1>} : vector<64x8xi32>
    %cst_98 = arith.constant -2.000000e+01 : f32
    %cst_99 = arith.constant 2.000000e+00 : f32
    %394 = vector.broadcast %cst_98 : f32 to vector<64x8xf32>
    %395 = arith.maximumf %394, %392 : vector<64x8xf32>
    %396 = vector.broadcast %cst_99 : f32 to vector<64x8xf32>
    %397 = arith.minimumf %396, %395 : vector<64x8xf32>
    %c4_i32 = arith.constant 4 : i32
    %398 = vector.broadcast %c4_i32 : i32 to vector<64x8xi32>
    %399 = arith.cmpi sge, %393, %398 : vector<64x8xi32>
    %400 = arith.select %399, %397, %392 : vector<64x8xi1>, vector<64x8xf32>
    %c0_100 = arith.constant 0 : index
    %c0_101 = arith.constant 0 : index
    %401 = vector.load %arg13[%c0_100, %c0_101] : memref<64x8xf32, #tpu.memory_space<vmem>>, vector<64x8xf32>
    tpu.vector_store %arg13[%c0_100, %c0_101], %400 {strides = array<i32>} : memref<64x8xf32, #tpu.memory_space<vmem>>, vector<64x8xf32>,
    return
  }
}

</mosaic_0001>

<llo_original>
// kernel: gaussian_policy_forward.1
$region0: #{gaussian_policy_forward.1}
  #allocation0 [shape = 'u32[]', space=smem, size = 0x4, offset = 0x4, fixed_abs, tag = 'smem constant byte address 0x4 - core index']
  #allocation1 [shape = 'u32[72,128]{1,0:T(1,128)}', space=vmem, size = 0x9000, scoped, tag = 'internal scratch']
  #allocation2 [shape = 'f32[64,32]{1,0:T(8,128)}', space=vmem, size = 0x8000, scoped, tag = 'scratch operand']
  %s0 = inlined_call_operand.vmem [shape: bf16[64,16], index: 0, kind: input, shape index: {}]
  %s1 = inlined_call_operand.vmem [shape: f32[2,8,32], index: 1, kind: input, shape index: {}]
  %s2 = inlined_call_operand.vmem [shape: f32[2,8,32], index: 2, kind: input, shape index: {}]
  %s3 = inlined_call_operand.vmem [shape: bf16[16,128], index: 3, kind: input, shape index: {}]
  %s4 = inlined_call_operand.vmem [shape: bf16[1,32,256], index: 4, kind: input, shape index: {}]
  %s5 = inlined_call_operand.vmem [shape: bf16[32,128], index: 5, kind: input, shape index: {}]
  %s6 = inlined_call_operand.vmem [shape: f32[2,1,128], index: 6, kind: input, shape index: {}]
  %s7 = inlined_call_operand.vmem [shape: bf16[32,32], index: 7, kind: input, shape index: {}]
  %s8 = inlined_call_operand.vmem [shape: f32[1,32], index: 8, kind: input, shape index: {}]
  %s9 = inlined_call_operand.vmem [shape: bf16[32,32], index: 9, kind: input, shape index: {}]
  %s10 = inlined_call_operand.vmem [shape: f32[1,32], index: 10, kind: input, shape index: {}]
  %s11 = inlined_call_operand.vmem [shape: bf16[32,8], index: 11, kind: input, shape index: {}]
  %s12 = inlined_call_operand.vmem [shape: f32[1,8], index: 12, kind: input, shape index: {}]
  %s13 = inlined_call_operand.vmem [shape: f32[64,8], index: 13, kind: output, shape index: {0}]
  %s14 = inlined_call_operand.hbm [shape: f32[2,8,32], index: 14, kind: output, shape index: {1}]
  %s15 = inlined_call_operand.hbm [shape: f32[2,8,32], index: 15, kind: output, shape index: {2}]
  %16 = xla_tuple %s13, %s14, %s15
  %s17 = sld [smem:[#allocation0]]
  $region78: #{gaussian_policy_forward.1} parent=0
    _
  %s19 = ssub.s32 1, %s17
  %s20 = scalar_select 0, %s19, %s17
  $region1: #{gaussian_policy_forward.1} parent=0
    #allocation3 [shape = 'u8[8192]{0}', space=vmem, size = 0x2000, scoped, tag = 'output window, operand 1, single buffered']
    #allocation4 [shape = 's32[1]{0}', space=sflag, size = 0x4, scoped, tag = 'scoped memory for gaussian_policy_forward.1']
    #allocation5 [shape = 'u8[8192]{0}', space=vmem, size = 0x2000, scoped, tag = 'output window, operand 2, single buffered']
    #allocation6 [shape = 's32[1]{0}', space=sflag, size = 0x4, scoped, tag = 'scoped memory for gaussian_policy_forward.1']
    %21 = vsyncpa [#allocation4], 0
    %22 = vsyncpa [#allocation6], 0
    // Predicated region
    $region2: #{gaussian_policy_forward.1} parent=1 // pred_check
      _
    $region3: #{gaussian_policy_forward.1} parent=1 // pred_check_branch
      %24 = sbr.rel (0) target = $region5
    $region4: #{gaussian_policy_forward.1} parent=1 // pred_region
      _
    $region5: #{gaussian_policy_forward.1} parent=1 // pred_fallthru
      _
    // Predicated region
    $region6: #{gaussian_policy_forward.1} parent=1 // pred_check
      _
    $region7: #{gaussian_policy_forward.1} parent=1 // pred_check_branch
      %26 = sbr.rel (0) target = $region9
    $region8: #{gaussian_policy_forward.1} parent=1 // pred_region
      _
    $region9: #{gaussian_policy_forward.1} parent=1 // pred_fallthru
      _
    // Predicated region
    $region10: #{gaussian_policy_forward.1} parent=1 // pred_check
      _
    $region11: #{gaussian_policy_forward.1} parent=1 // pred_check_branch
      %28 = sbr.rel (0) target = $region13
    $region12: #{gaussian_policy_forward.1} parent=1 // pred_region
      _
    $region13: #{gaussian_policy_forward.1} parent=1 // pred_fallthru
      _
    // Predicated region
    $region14: #{gaussian_policy_forward.1} parent=1 // pred_check
      _
    $region15: #{gaussian_policy_forward.1} parent=1 // pred_check_branch
      %30 = sbr.rel (0) target = $region17
    $region16: #{gaussian_policy_forward.1} parent=1 // pred_region
      _
    $region17: #{gaussian_policy_forward.1} parent=1 // pred_fallthru
      _
    // Predicated region
    $region18: #{gaussian_policy_forward.1} parent=1 // pred_check
      _
    $region19: #{gaussian_policy_forward.1} parent=1 // pred_check_branch
      %32 = sbr.rel (0) target = $region21
    $region20: #{gaussian_policy_forward.1} parent=1 // pred_region
      _
    $region21: #{gaussian_policy_forward.1} parent=1 // pred_fallthru
      _
    // Predicated region
    $region22: #{gaussian_policy_forward.1} parent=1 // pred_check
      _
    $region23: #{gaussian_policy_forward.1} parent=1 // pred_check_branch
      %34 = sbr.rel (0) target = $region25
    $region24: #{gaussian_policy_forward.1} parent=1 // pred_region
      _
    $region25: #{gaussian_policy_forward.1} parent=1 // pred_fallthru
      _
    // Predicated region
    $region26: #{gaussian_policy_forward.1} parent=1 // pred_check
      _
    $region27: #{gaussian_policy_forward.1} parent=1 // pred_check_branch
      %36 = sbr.rel (0) target = $region29
    $region28: #{gaussian_policy_forward.1} parent=1 // pred_region
      _
    $region29: #{gaussian_policy_forward.1} parent=1 // pred_fallthru
      _
    // Predicated region
    $region30: #{gaussian_policy_forward.1} parent=1 // pred_check
      _
    $region31: #{gaussian_policy_forward.1} parent=1 // pred_check_branch
      %38 = sbr.rel (0) target = $region33
    $region32: #{gaussian_policy_forward.1} parent=1 // pred_region
      _
    $region33: #{gaussian_policy_forward.1} parent=1 // pred_fallthru
      _
    // Predicated region
    $region34: #{gaussian_policy_forward.1} parent=1 // pred_check
      _
    $region35: #{gaussian_policy_forward.1} parent=1 // pred_check_branch
      %40 = sbr.rel (0) target = $region37
    $region36: #{gaussian_policy_forward.1} parent=1 // pred_region
      _
    $region37: #{gaussian_policy_forward.1} parent=1 // pred_fallthru
      _
    // Predicated region
    $region38: #{gaussian_policy_forward.1} parent=1 // pred_check
      _
    $region39: #{gaussian_policy_forward.1} parent=1 // pred_check_branch
      %42 = sbr.rel (0) target = $region41
    $region40: #{gaussian_policy_forward.1} parent=1 // pred_region
      _
    $region41: #{gaussian_policy_forward.1} parent=1 // pred_fallthru
      _
    // Predicated region
    $region42: #{gaussian_policy_forward.1} parent=1 // pred_check
      _
    $region43: #{gaussian_policy_forward.1} parent=1 // pred_check_branch
      %44 = sbr.rel (0) target = $region45
    $region44: #{gaussian_policy_forward.1} parent=1 // pred_region
      _
    $region45: #{gaussian_policy_forward.1} parent=1 // pred_fallthru
      _
    // Predicated region
    $region46: #{gaussian_policy_forward.1} parent=1 // pred_check
      _
    $region47: #{gaussian_policy_forward.1} parent=1 // pred_check_branch
      %46 = sbr.rel (0) target = $region49
    $region48: #{gaussian_policy_forward.1} parent=1 // pred_region
      _
    $region49: #{gaussian_policy_forward.1} parent=1 // pred_fallthru
      _
    // Predicated region
    $region50: #{gaussian_policy_forward.1} parent=1 // pred_check
      _
    $region51: #{gaussian_policy_forward.1} parent=1 // pred_check_branch
      %48 = sbr.rel (0) target = $region53
    $region52: #{gaussian_policy_forward.1} parent=1 // pred_region
      _
    $region53: #{gaussian_policy_forward.1} parent=1 // pred_fallthru
      _
    %v50 = vld [vmem:[%s0] sm:$0xf]
    %v51 = vld [vmem:[%s0 + $0x4] sm:$0xf]
    %v52 = vld [vmem:[%s0 + $0x8] sm:$0xf]
    %v53 = vld [vmem:[%s0 + $0xc] sm:$0xf]
    %v54 = vld [vmem:[%s0 + $0x10] sm:$0xf]
    %v55 = vld [vmem:[%s0 + $0x14] sm:$0xf]
    %v56 = vld [vmem:[%s0 + $0x18] sm:$0xf]
    %v57 = vld [vmem:[%s0 + $0x1c] sm:$0xf]
    %v58 = vld [vmem:[%s3] sm:$0xf]
    %v59 = vld [vmem:[%s3 + $0x4] sm:$0xf]
    %v60 = vld [vmem:[%s6] sm:$0x1]
    %v62 = vperm.slane %v60, 0
    %v72 = vunpack.c.l.b16 %v50
    %v73 = vunpack.c.l.b16 %v51
    %v74 = vunpack.c.l.b16 %v52
    %v75 = vunpack.c.l.b16 %v53
    %v76 = vunpack.c.l.b16 %v54
    %v77 = vunpack.c.l.b16 %v55
    %v78 = vunpack.c.l.b16 %v56
    %v79 = vunpack.c.l.b16 %v57
    %v80 = vpack.c.b16 %v73, %v72
    %v81 = vpack.c.b16 %v75, %v74
    %v82 = vpack.c.b16 %v77, %v76
    %v83 = vpack.c.b16 %v79, %v78
    %v86 = vunpack.c.l.b16 %v58
    %v87 = vunpack.c.l.b16 %v59
    %v88 = vpack.c.b16 %v87, %v86
    %vm90 = vcmask 130048
    %v92 = vsel %vm90, %v80, 0
    %v95 = vsel %vm90, %v81, 0
    %v98 = vsel %vm90, %v82, 0
    %v101 = vsel %vm90, %v83, 0
    %103 = vmatpush.bf16.msra.mxu0 0
    %104 = vmatpush.bf16.msra.mxu0 0
    %105 = vmatpush.bf16.msra.mxu0 0
    %106 = vmatpush.bf16.msra.mxu0 0
    %107 = vmatpush.bf16.msra.mxu0 0
    %108 = vmatpush.bf16.msra.mxu0 0
    %109 = vmatpush.bf16.msra.mxu0 0
    %110 = vmatpush.bf16.msra.mxu0 %v88
    %111 = vmatmul.bf16.gmra.mxu0 %v92
    %v112 = vpop.f32.mrf.mxu0
    %v113 = vadd.f32 %v62, %v112
    %v114 = vpop.f32.mrf.mxu0
    %v115 = vadd.f32 %v62, %v114
    %116 = vmatmul.bf16.gmra.mxu0 %v95
    %v117 = vpop.f32.mrf.mxu0
    %v118 = vadd.f32 %v62, %v117
    %v119 = vpop.f32.mrf.mxu0
    %v120 = vadd.f32 %v62, %v119
    %121 = vmatmul.bf16.gmra.mxu0 %v98
    %v122 = vpop.f32.mrf.mxu0
    %v123 = vadd.f32 %v62, %v122
    %v124 = vpop.f32.mrf.mxu0
    %v125 = vadd.f32 %v62, %v124
    %126 = vmatmul.bf16.gmra.mxu0 %v101
    %v127 = vpop.f32.mrf.mxu0
    %v128 = vadd.f32 %v62, %v127
    %v129 = vpop.f32.mrf.mxu0
    %v130 = vadd.f32 %v62, %v129
    %131 = vdwg.mxu0
    %v132 = vld [vmem:[%s4] sm:$0xff]
    %v133 = vld [vmem:[%s4 + $0x8] sm:$0xff]
    %v134 = vld [vmem:[%s4 + $0x10] sm:$0xff]
    %v135 = vld [vmem:[%s4 + $0x18] sm:$0xff]
    %v136 = vld [vmem:[%s5] sm:$0xf]
    %v137 = vld [vmem:[%s5 + $0x4] sm:$0xf]
    %v138 = vld [vmem:[%s5 + $0x8] sm:$0xf]
    %v139 = vld [vmem:[%s5 + $0xc] sm:$0xf]
    %s140 = scalar_lea.vmem %s6, 1
    %v141 = vld [vmem:[%s140] sm:$0x1]
    %v142 = vld [vmem:[%s1] sm:$0xff]
    %s143 = scalar_lea.vmem %s1, 8
    %v144 = vld [vmem:[%s143] sm:$0xff]
    %v145 = vld [vmem:[%s2] sm:$0xff]
    %s146 = scalar_lea.vmem %s2, 8
    %v147 = vld [vmem:[%s146] sm:$0xff]
    %v148 = vpack.c.bf16 %v142, %v142
    %v153 = vunpack.c.l.b16 %v132
    %v154 = vunpack.c.l.b16 %v133
    %v155 = vunpack.c.l.b16 %v134
    %v156 = vunpack.c.l.b16 %v135
    %v157 = vpack.c.b16 %v154, %v153
    %v158 = vpack.c.b16 %v156, %v155
    %vm161 = vcmask 261120
    %v163 = vsel %vm161, %v148, 0
    %165 = vmatpush.bf16.msra.mxu0 0
    %166 = vmatpush.bf16.msra.mxu0 0
    %167 = vmatpush.bf16.msra.mxu0 0
    %168 = vmatpush.bf16.msra.mxu0 0
    %169 = vmatpush.bf16.msra.mxu0 0
    %170 = vmatpush.bf16.msra.mxu0 0
    %171 = vmatpush.bf16.msra.mxu0 %v158
    %172 = vmatpush.bf16.msra.mxu0 %v157
    %173 = vmatmul.bf16.gmra.mxu0 %v163
    %v174 = vpop.f32.mrf.mxu0
    %v175 = vadd.f32 0.0, %v174
    %v176 = vpop.f32.mrf.mxu0
    %177 = vdwg.mxu0
    %v178 = vadd.f32 %v113, %v175
    %v179 = vxor.u32 %v178, 2147483648
    %v180 = vmul.f32 %v179, 1.442695
    %v181 = vpow.pop %v180
    %v182 = vadd.f32 %v181, 1.0
    %v183 = vrcp.pop %v182
    %v184 = vmul.f32 %v182, %v183
    %v185 = vsub.f32 1.0, %v184
    %v186 = vmul.f32 %v183, %v185
    %v187 = vadd.f32 %v183, %v186
    %vm188 = vweird.f32 %v182
    %vm189 = vweird.f32 %v183
    %vm190 = vmor %vm188, %vm189
    %v191 = vsel %vm190, %v183, %v187
    %v192 = vand.u32 2147483647, %v182
    %vm193 = vcmp.eq.f32.partialorder %v192, 8.507059e+37
    %v194 = vand.u32 %v182, 2147483648
    %v195 = vor.u32 1.1754944e-38, %v194
    %v196 = vsel %vm193, %v195, %v191
    %v197 = vmul.f32 1.0, %v196
    %v198 = vtanh.pop %v178
    %200 = vrot.lane.b32.xlu0 %v145, 32
    %v201 = vpop.permute.xlu0 %200
    %v203 = vmul.f32 %v197, %v201
    %205 = vrot.lane.b32.xlu0 %v198, 64
    %v206 = vpop.permute.xlu0 %205
    %v208 = vmul.f32 %v197, %v206
    %210 = vrot.lane.b32.xlu0 %v208, 32
    %v211 = vpop.permute.xlu0 %210
    %v213 = vadd.f32 %v203, %v211
    %v214 = vtanh.pop %v213
    %216 = vrot.lane.b32.xlu0 %v214, 64
    %v217 = vpop.permute.xlu0 %216
    %v219 = vmul.f32 %v197, %v217
    %v220 = vpack.c.bf16 %v219, %v219
    %222 = vrot.lane.b32.xlu0 %v220, 32
    %v223 = vpop.permute.xlu0 %222
    %v224 = vunpack.c.h.b16 %v132
    %v225 = vunpack.c.h.b16 %v133
    %v226 = vunpack.c.h.b16 %v134
    %v227 = vunpack.c.h.b16 %v135
    %v228 = vpack.c.b16 %v225, %v224
    %v229 = vpack.c.b16 %v227, %v226
    %v233 = vsel %vm161, %v223, 0
    %235 = vmatpush.bf16.msra.mxu0 0
    %236 = vmatpush.bf16.msra.mxu0 0
    %237 = vmatpush.bf16.msra.mxu0 0
    %238 = vmatpush.bf16.msra.mxu0 0
    %239 = vmatpush.bf16.msra.mxu0 0
    %240 = vmatpush.bf16.msra.mxu0 0
    %241 = vmatpush.bf16.msra.mxu0 %v158
    %242 = vmatpush.bf16.msra.mxu0 %v157
    %243 = vmatmul.bf16.gmra.mxu0 %v233
    %v244 = vpop.f32.mrf.mxu0
    %v245 = vadd.f32 0.0, %v244
    %v246 = vpop.f32.mrf.mxu0
    %247 = vdwg.mxu0
    %248 = vmatpush.bf16.msra.mxu0 0
    %249 = vmatpush.bf16.msra.mxu0 0
    %250 = vmatpush.bf16.msra.mxu0 0
    %251 = vmatpush.bf16.msra.mxu0 0
    %252 = vmatpush.bf16.msra.mxu0 0
    %253 = vmatpush.bf16.msra.mxu0 0
    %254 = vmatpush.bf16.msra.mxu0 %v229
    %255 = vmatpush.bf16.msra.mxu0 %v228
    %256 = vmatmul.bf16.gmra.mxu0 %v233
    %v257 = vpop.f32.mrf.mxu0
    %v258 = vadd.f32 0.0, %v257
    %v259 = vpop.f32.mrf.mxu0
    %260 = vdwg.mxu0
    %v261 = vpack.c.bf16 %v144, %v144
    %v266 = vunpack.c.l.b16 %v136
    %v267 = vunpack.c.l.b16 %v137
    %v268 = vunpack.c.l.b16 %v138
    %v269 = vunpack.c.l.b16 %v139
    %v270 = vpack.c.b16 %v267, %v266
    %v271 = vpack.c.b16 %v269, %v268
    %v275 = vsel %vm161, %v261, 0
    %277 = vmatpush.bf16.msra.mxu0 0
    %278 = vmatpush.bf16.msra.mxu0 0
    %279 = vmatpush.bf16.msra.mxu0 0
    %280 = vmatpush.bf16.msra.mxu0 0
    %281 = vmatpush.bf16.msra.mxu0 0
    %282 = vmatpush.bf16.msra.mxu0 0
    %283 = vmatpush.bf16.msra.mxu0 %v271
    %284 = vmatpush.bf16.msra.mxu0 %v270
    %285 = vmatmul.bf16.gmra.mxu0 %v275
    %v286 = vpop.f32.mrf.mxu0
    %v287 = vadd.f32 0.0, %v286
    %v288 = vpop.f32.mrf.mxu0
    %289 = vdwg.mxu0
    %v290 = vadd.f32 %v115, %v245
    %v291 = vxor.u32 %v290, 2147483648
    %v292 = vmul.f32 %v291, 1.442695
    %v293 = vpow.pop %v292
    %v294 = vadd.f32 %v293, 1.0
    %v295 = vrcp.pop %v294
    %v296 = vmul.f32 %v294, %v295
    %v297 = vsub.f32 1.0, %v296
    %v298 = vmul.f32 %v295, %v297
    %v299 = vadd.f32 %v295, %v298
    %vm300 = vweird.f32 %v294
    %vm301 = vweird.f32 %v295
    %vm302 = vmor %vm300, %vm301
    %v303 = vsel %vm302, %v295, %v299
    %v304 = vand.u32 2147483647, %v294
    %vm305 = vcmp.eq.f32.partialorder %v304, 8.507059e+37
    %v306 = vand.u32 %v294, 2147483648
    %v307 = vor.u32 1.1754944e-38, %v306
    %v308 = vsel %vm305, %v307, %v303
    %v309 = vmul.f32 1.0, %v308
    %v310 = vtanh.pop %v290
    %v311 = vmul.f32 %v309, %v213
    %313 = vrot.lane.b32.xlu0 %v310, 64
    %v314 = vpop.permute.xlu0 %313
    %v316 = vmul.f32 %v309, %v314
    %318 = vrot.lane.b32.xlu0 %v316, 32
    %v319 = vpop.permute.xlu0 %318
    %v321 = vadd.f32 %v311, %v319
    %v322 = vtanh.pop %v321
    %324 = vrot.lane.b32.xlu0 %v322, 64
    %v325 = vpop.permute.xlu0 %324
    %v327 = vmul.f32 %v309, %v325
    %v328 = vadd.f32 %v258, %v287
    %v330 = vperm.slane %v141, 0
    %v332 = vadd.f32 %v328, %v330
    %v333 = vxor.u32 %v332, 2147483648
    %v334 = vmul.f32 %v333, 1.442695
    %v335 = vpow.pop %v334
    %v336 = vadd.f32 %v335, 1.0
    %v337 = vrcp.pop %v336
    %v338 = vmul.f32 %v336, %v337
    %v339 = vsub.f32 1.0, %v338
    %v340 = vmul.f32 %v337, %v339
    %v341 = vadd.f32 %v337, %v340
    %vm342 = vweird.f32 %v336
    %vm343 = vweird.f32 %v337
    %vm344 = vmor %vm342, %vm343
    %v345 = vsel %vm344, %v337, %v341
    %v346 = vand.u32 2147483647, %v336
    %vm347 = vcmp.eq.f32.partialorder %v346, 8.507059e+37
    %v348 = vand.u32 %v336, 2147483648
    %v349 = vor.u32 1.1754944e-38, %v348
    %v350 = vsel %vm347, %v349, %v345
    %v351 = vmul.f32 1.0, %v350
    %v352 = vtanh.pop %v332
    %354 = vrot.lane.b32.xlu0 %v147, 32
    %v355 = vpop.permute.xlu0 %354
    %v357 = vmul.f32 %v351, %v355
    %359 = vrot.lane.b32.xlu0 %v352, 64
    %v360 = vpop.permute.xlu0 %359
    %v362 = vmul.f32 %v351, %v360
    %364 = vrot.lane.b32.xlu0 %v362, 32
    %v365 = vpop.permute.xlu0 %364
    %v367 = vadd.f32 %v357, %v365
    %v368 = vtanh.pop %v367
    %370 = vrot.lane.b32.xlu0 %v368, 64
    %v371 = vpop.permute.xlu0 %370
    %v373 = vmul.f32 %v351, %v371
    %375 = vrot.lane.b32.xlu0 %v373, 32
    %v376 = vpop.permute.xlu0 %375
    %378 = vst.msk [vmem:[#allocation2] sm:$0xff] %vm161, %v376
    %v379 = vpack.c.bf16 %v327, %v327
    %381 = vrot.lane.b32.xlu0 %v379, 32
    %v382 = vpop.permute.xlu0 %381
    %v384 = vsel %vm161, %v382, 0
    %386 = vmatpush.bf16.msra.mxu0 0
    %387 = vmatpush.bf16.msra.mxu0 0
    %388 = vmatpush.bf16.msra.mxu0 0
    %389 = vmatpush.bf16.msra.mxu0 0
    %390 = vmatpush.bf16.msra.mxu0 0
    %391 = vmatpush.bf16.msra.mxu0 0
    %392 = vmatpush.bf16.msra.mxu0 %v158
    %393 = vmatpush.bf16.msra.mxu0 %v157
    %394 = vmatmul.bf16.gmra.mxu0 %v384
    %v395 = vpop.f32.mrf.mxu0
    %v396 = vadd.f32 0.0, %v395
    %v397 = vpop.f32.mrf.mxu0
    %398 = vdwg.mxu0
    %399 = vmatpush.bf16.msra.mxu0 0
    %400 = vmatpush.bf16.msra.mxu0 0
    %401 = vmatpush.bf16.msra.mxu0 0
    %402 = vmatpush.bf16.msra.mxu0 0
    %403 = vmatpush.bf16.msra.mxu0 0
    %404 = vmatpush.bf16.msra.mxu0 0
    %405 = vmatpush.bf16.msra.mxu0 %v229
    %406 = vmatpush.bf16.msra.mxu0 %v228
    %407 = vmatmul.bf16.gmra.mxu0 %v384
    %v408 = vpop.f32.mrf.mxu0
    %v409 = vadd.f32 0.0, %v408
    %v410 = vpop.f32.mrf.mxu0
    %411 = vdwg.mxu0
    %v412 = vpack.c.bf16 %v373, %v373
    %414 = vrot.lane.b32.xlu0 %v412, 32
    %v415 = vpop.permute.xlu0 %414
    %v417 = vsel %vm161, %v415, 0
    %419 = vmatpush.bf16.msra.mxu0 0
    %420 = vmatpush.bf16.msra.mxu0 0
    %421 = vmatpush.bf16.msra.mxu0 0
    %422 = vmatpush.bf16.msra.mxu0 0
    %423 = vmatpush.bf16.msra.mxu0 0
    %424 = vmatpush.bf16.msra.mxu0 0
    %425 = vmatpush.bf16.msra.mxu0 %v271
    %426 = vmatpush.bf16.msra.mxu0 %v270
    %427 = vmatmul.bf16.gmra.mxu0 %v417
    %v428 = vpop.f32.mrf.mxu0
    %v429 = vadd.f32 0.0, %v428
    %v430 = vpop.f32.mrf.mxu0
    %431 = vdwg.mxu0
    %v432 = vadd.f32 %v118, %v396
    %v433 = vxor.u32 %v432, 2147483648
    %v434 = vmul.f32 %v433, 1.442695
    %v435 = vpow.pop %v434
    %v436 = vadd.f32 %v435, 1.0
    %v437 = vrcp.pop %v436
    %v438 = vmul.f32 %v436, %v437
    %v439 = vsub.f32 1.0, %v438
    %v440 = vmul.f32 %v437, %v439
    %v441 = vadd.f32 %v437, %v440
    %vm442 = vweird.f32 %v436
    %vm443 = vweird.f32 %v437
    %vm444 = vmor %vm442, %vm443
    %v445 = vsel %vm444, %v437, %v441
    %v446 = vand.u32 2147483647, %v436
    %vm447 = vcmp.eq.f32.partialorder %v446, 8.507059e+37
    %v448 = vand.u32 %v436, 2147483648
    %v449 = vor.u32 1.1754944e-38, %v448
    %v450 = vsel %vm447, %v449, %v445
    %v451 = vmul.f32 1.0, %v450
    %v452 = vtanh.pop %v432
    %v453 = vmul.f32 %v451, %v321
    %455 = vrot.lane.b32.xlu0 %v452, 64
    %v456 = vpop.permute.xlu0 %455
    %v458 = vmul.f32 %v451, %v456
    %460 = vrot.lane.b32.xlu0 %v458, 32
    %v461 = vpop.permute.xlu0 %460
    %v463 = vadd.f32 %v453, %v461
    %v464 = vtanh.pop %v463
    %466 = vrot.lane.b32.xlu0 %v464, 64
    %v467 = vpop.permute.xlu0 %466
    %v469 = vmul.f32 %v451, %v467
    %v470 = vadd.f32 %v409, %v429
    %v471 = vadd.f32 %v470, %v330
    %v472 = vxor.u32 %v471, 2147483648
    %v473 = vmul.f32 %v472, 1.442695
    %v474 = vpow.pop %v473
    %v475 = vadd.f32 %v474, 1.0
    %v476 = vrcp.pop %v475
    %v477 = vmul.f32 %v475, %v476
    %v478 = vsub.f32 1.0, %v477
    %v479 = vmul.f32 %v476, %v478
    %v480 = vadd.f32 %v476, %v479
    %vm481 = vweird.f32 %v475
    %vm482 = vweird.f32 %v476
    %vm483 = vmor %vm481, %vm482
    %v484 = vsel %vm483, %v476, %v480
    %v485 = vand.u32 2147483647, %v475
    %vm486 = vcmp.eq.f32.partialorder %v485, 8.507059e+37
    %v487 = vand.u32 %v475, 2147483648
    %v488 = vor.u32 1.1754944e-38, %v487
    %v489 = vsel %vm486, %v488, %v484
    %v490 = vmul.f32 1.0, %v489
    %v491 = vtanh.pop %v471
    %v492 = vmul.f32 %v490, %v367
    %494 = vrot.lane.b32.xlu0 %v491, 64
    %v495 = vpop.permute.xlu0 %494
    %v497 = vmul.f32 %v490, %v495
    %499 = vrot.lane.b32.xlu0 %v497, 32
    %v500 = vpop.permute.xlu0 %499
    %v502 = vadd.f32 %v492, %v500
    %v503 = vtanh.pop %v502
    %505 = vrot.lane.b32.xlu0 %v503, 64
    %v506 = vpop.permute.xlu0 %505
    %v508 = vmul.f32 %v490, %v506
    %510 = vrot.lane.b32.xlu0 %v508, 32
    %v511 = vpop.permute.xlu0 %510
    %513 = vst.msk [vmem:[#allocation2 + $0x8] sm:$0xff] %vm161, %v511
    %v514 = vpack.c.bf16 %v469, %v469
    %516 = vrot.lane.b32.xlu0 %v514, 32
    %v517 = vpop.permute.xlu0 %516
    %v519 = vsel %vm161, %v517, 0
    %521 = vmatpush.bf16.msra.mxu0 0
    %522 = vmatpush.bf16.msra.mxu0 0
    %523 = vmatpush.bf16.msra.mxu0 0
    %524 = vmatpush.bf16.msra.mxu0 0
    %525 = vmatpush.bf16.msra.mxu0 0
    %526 = vmatpush.bf16.msra.mxu0 0
    %527 = vmatpush.bf16.msra.mxu0 %v158
    %528 = vmatpush.bf16.msra.mxu0 %v157
    %529 = vmatmul.bf16.gmra.mxu0 %v519
    %v530 = vpop.f32.mrf.mxu0
    %v531 = vadd.f32 0.0, %v530
    %v532 = vpop.f32.mrf.mxu0
    %533 = vdwg.mxu0
    %534 = vmatpush.bf16.msra.mxu0 0
    %535 = vmatpush.bf16.msra.mxu0 0
    %536 = vmatpush.bf16.msra.mxu0 0
    %537 = vmatpush.bf16.msra.mxu0 0
    %538 = vmatpush.bf16.msra.mxu0 0
    %539 = vmatpush.bf16.msra.mxu0 0
    %540 = vmatpush.bf16.msra.mxu0 %v229
    %541 = vmatpush.bf16.msra.mxu0 %v228
    %542 = vmatmul.bf16.gmra.mxu0 %v519
    %v543 = vpop.f32.mrf.mxu0
    %v544 = vadd.f32 0.0, %v543
    %v545 = vpop.f32.mrf.mxu0
    %546 = vdwg.mxu0
    %v547 = vpack.c.bf16 %v508, %v508
    %549 = vrot.lane.b32.xlu0 %v547, 32
    %v550 = vpop.permute.xlu0 %549
    %v552 = vsel %vm161, %v550, 0
    %554 = vmatpush.bf16.msra.mxu0 0
    %555 = vmatpush.bf16.msra.mxu0 0
    %556 = vmatpush.bf16.msra.mxu0 0
    %557 = vmatpush.bf16.msra.mxu0 0
    %558 = vmatpush.bf16.msra.mxu0 0
    %559 = vmatpush.bf16.msra.mxu0 0
    %560 = vmatpush.bf16.msra.mxu0 %v271
    %561 = vmatpush.bf16.msra.mxu0 %v270
    %562 = vmatmul.bf16.gmra.mxu0 %v552
    %v563 = vpop.f32.mrf.mxu0
    %v564 = vadd.f32 0.0, %v563
    %v565 = vpop.f32.mrf.mxu0
    %566 = vdwg.mxu0
    %v567 = vadd.f32 %v120, %v531
    %v568 = vxor.u32 %v567, 2147483648
    %v569 = vmul.f32 %v568, 1.442695
    %v570 = vpow.pop %v569
    %v571 = vadd.f32 %v570, 1.0
    %v572 = vrcp.pop %v571
    %v573 = vmul.f32 %v571, %v572
    %v574 = vsub.f32 1.0, %v573
    %v575 = vmul.f32 %v572, %v574
    %v576 = vadd.f32 %v572, %v575
    %vm577 = vweird.f32 %v571
    %vm578 = vweird.f32 %v572
    %vm579 = vmor %vm577, %vm578
    %v580 = vsel %vm579, %v572, %v576
    %v581 = vand.u32 2147483647, %v571
    %vm582 = vcmp.eq.f32.partialorder %v581, 8.507059e+37
    %v583 = vand.u32 %v571, 2147483648
    %v584 = vor.u32 1.1754944e-38, %v583
    %v585 = vsel %vm582, %v584, %v580
    %v586 = vmul.f32 1.0, %v585
    %v587 = vtanh.pop %v567
    %v588 = vmul.f32 %v586, %v463
    %590 = vrot.lane.b32.xlu0 %v587, 64
    %v591 = vpop.permute.xlu0 %590
    %v593 = vmul.f32 %v586, %v591
    %595 = vrot.lane.b32.xlu0 %v593, 32
    %v596 = vpop.permute.xlu0 %595
    %v598 = vadd.f32 %v588, %v596
    %v599 = vtanh.pop %v598
    %601 = vrot.lane.b32.xlu0 %v599, 64
    %v602 = vpop.permute.xlu0 %601
    %v604 = vmul.f32 %v586, %v602
    %v605 = vadd.f32 %v544, %v564
    %v606 = vadd.f32 %v605, %v330
    %v607 = vxor.u32 %v606, 2147483648
    %v608 = vmul.f32 %v607, 1.442695
    %v609 = vpow.pop %v608
    %v610 = vadd.f32 %v609, 1.0
    %v611 = vrcp.pop %v610
    %v612 = vmul.f32 %v610, %v611
    %v613 = vsub.f32 1.0, %v612
    %v614 = vmul.f32 %v611, %v613
    %v615 = vadd.f32 %v611, %v614
    %vm616 = vweird.f32 %v610
    %vm617 = vweird.f32 %v611
    %vm618 = vmor %vm616, %vm617
    %v619 = vsel %vm618, %v611, %v615
    %v620 = vand.u32 2147483647, %v610
    %vm621 = vcmp.eq.f32.partialorder %v620, 8.507059e+37
    %v622 = vand.u32 %v610, 2147483648
    %v623 = vor.u32 1.1754944e-38, %v622
    %v624 = vsel %vm621, %v623, %v619
    %v625 = vmul.f32 1.0, %v624
    %v626 = vtanh.pop %v606
    %v627 = vmul.f32 %v625, %v502
    %629 = vrot.lane.b32.xlu0 %v626, 64
    %v630 = vpop.permute.xlu0 %629
    %v632 = vmul.f32 %v625, %v630
    %634 = vrot.lane.b32.xlu0 %v632, 32
    %v635 = vpop.permute.xlu0 %634
    %v637 = vadd.f32 %v627, %v635
    %v638 = vtanh.pop %v637
    %640 = vrot.lane.b32.xlu0 %v638, 64
    %v641 = vpop.permute.xlu0 %640
    %v643 = vmul.f32 %v625, %v641
    %645 = vrot.lane.b32.xlu0 %v643, 32
    %v646 = vpop.permute.xlu0 %645
    %648 = vst.msk [vmem:[#allocation2 + $0x10] sm:$0xff] %vm161, %v646
    %v649 = vpack.c.bf16 %v604, %v604
    %651 = vrot.lane.b32.xlu0 %v649, 32
    %v652 = vpop.permute.xlu0 %651
    %v654 = vsel %vm161, %v652, 0
    %656 = vmatpush.bf16.msra.mxu0 0
    %657 = vmatpush.bf16.msra.mxu0 0
    %658 = vmatpush.bf16.msra.mxu0 0
    %659 = vmatpush.bf16.msra.mxu0 0
    %660 = vmatpush.bf16.msra.mxu0 0
    %661 = vmatpush.bf16.msra.mxu0 0
    %662 = vmatpush.bf16.msra.mxu0 %v158
    %663 = vmatpush.bf16.msra.mxu0 %v157
    %664 = vmatmul.bf16.gmra.mxu0 %v654
    %v665 = vpop.f32.mrf.mxu0
    %v666 = vadd.f32 0.0, %v665
    %v667 = vpop.f32.mrf.mxu0
    %668 = vdwg.mxu0
    %669 = vmatpush.bf16.msra.mxu0 0
    %670 = vmatpush.bf16.msra.mxu0 0
    %671 = vmatpush.bf16.msra.mxu0 0
    %672 = vmatpush.bf16.msra.mxu0 0
    %673 = vmatpush.bf16.msra.mxu0 0
    %674 = vmatpush.bf16.msra.mxu0 0
    %675 = vmatpush.bf16.msra.mxu0 %v229
    %676 = vmatpush.bf16.msra.mxu0 %v228
    %677 = vmatmul.bf16.gmra.mxu0 %v654
    %v678 = vpop.f32.mrf.mxu0
    %v679 = vadd.f32 0.0, %v678
    %v680 = vpop.f32.mrf.mxu0
    %681 = vdwg.mxu0
    %v682 = vpack.c.bf16 %v643, %v643
    %684 = vrot.lane.b32.xlu0 %v682, 32
    %v685 = vpop.permute.xlu0 %684
    %v687 = vsel %vm161, %v685, 0
    %689 = vmatpush.bf16.msra.mxu0 0
    %690 = vmatpush.bf16.msra.mxu0 0
    %691 = vmatpush.bf16.msra.mxu0 0
    %692 = vmatpush.bf16.msra.mxu0 0
    %693 = vmatpush.bf16.msra.mxu0 0
    %694 = vmatpush.bf16.msra.mxu0 0
    %695 = vmatpush.bf16.msra.mxu0 %v271
    %696 = vmatpush.bf16.msra.mxu0 %v270
    %697 = vmatmul.bf16.gmra.mxu0 %v687
    %v698 = vpop.f32.mrf.mxu0
    %v699 = vadd.f32 0.0, %v698
    %v700 = vpop.f32.mrf.mxu0
    %701 = vdwg.mxu0
    %v702 = vadd.f32 %v123, %v666
    %v703 = vxor.u32 %v702, 2147483648
    %v704 = vmul.f32 %v703, 1.442695
    %v705 = vpow.pop %v704
    %v706 = vadd.f32 %v705, 1.0
    %v707 = vrcp.pop %v706
    %v708 = vmul.f32 %v706, %v707
    %v709 = vsub.f32 1.0, %v708
    %v710 = vmul.f32 %v707, %v709
    %v711 = vadd.f32 %v707, %v710
    %vm712 = vweird.f32 %v706
    %vm713 = vweird.f32 %v707
    %vm714 = vmor %vm712, %vm713
    %v715 = vsel %vm714, %v707, %v711
    %v716 = vand.u32 2147483647, %v706
    %vm717 = vcmp.eq.f32.partialorder %v716, 8.507059e+37
    %v718 = vand.u32 %v706, 2147483648
    %v719 = vor.u32 1.1754944e-38, %v718
    %v720 = vsel %vm717, %v719, %v715
    %v721 = vmul.f32 1.0, %v720
    %v722 = vtanh.pop %v702
    %v723 = vmul.f32 %v721, %v598
    %725 = vrot.lane.b32.xlu0 %v722, 64
    %v726 = vpop.permute.xlu0 %725
    %v728 = vmul.f32 %v721, %v726
    %730 = vrot.lane.b32.xlu0 %v728, 32
    %v731 = vpop.permute.xlu0 %730
    %v733 = vadd.f32 %v723, %v731
    %v734 = vtanh.pop %v733
    %736 = vrot.lane.b32.xlu0 %v734, 64
    %v737 = vpop.permute.xlu0 %736
    %v739 = vmul.f32 %v721, %v737
    %v740 = vadd.f32 %v679, %v699
    %v741 = vadd.f32 %v740, %v330
    %v742 = vxor.u32 %v741, 2147483648
    %v743 = vmul.f32 %v742, 1.442695
    %v744 = vpow.pop %v743
    %v745 = vadd.f32 %v744, 1.0
    %v746 = vrcp.pop %v745
    %v747 = vmul.f32 %v745, %v746
    %v748 = vsub.f32 1.0, %v747
    %v749 = vmul.f32 %v746, %v748
    %v750 = vadd.f32 %v746, %v749
    %vm751 = vweird.f32 %v745
    %vm752 = vweird.f32 %v746
    %vm753 = vmor %vm751, %vm752
    %v754 = vsel %vm753, %v746, %v750
    %v755 = vand.u32 2147483647, %v745
    %vm756 = vcmp.eq.f32.partialorder %v755, 8.507059e+37
    %v757 = vand.u32 %v745, 2147483648
    %v758 = vor.u32 1.1754944e-38, %v757
    %v759 = vsel %vm756, %v758, %v754
    %v760 = vmul.f32 1.0, %v759
    %v761 = vtanh.pop %v741
    %v762 = vmul.f32 %v760, %v637
    %764 = vrot.lane.b32.xlu0 %v761, 64
    %v765 = vpop.permute.xlu0 %764
    %v767 = vmul.f32 %v760, %v765
    %769 = vrot.lane.b32.xlu0 %v767, 32
    %v770 = vpop.permute.xlu0 %769
    %v772 = vadd.f32 %v762, %v770
    %v773 = vtanh.pop %v772
    %775 = vrot.lane.b32.xlu0 %v773, 64
    %v776 = vpop.permute.xlu0 %775
    %v778 = vmul.f32 %v760, %v776
    %780 = vrot.lane.b32.xlu0 %v778, 32
    %v781 = vpop.permute.xlu0 %780
    %783 = vst.msk [vmem:[#allocation2 + $0x18] sm:$0xff] %vm161, %v781
    %v784 = vpack.c.bf16 %v739, %v739
    %786 = vrot.lane.b32.xlu0 %v784, 32
    %v787 = vpop.permute.xlu0 %786
    %v789 = vsel %vm161, %v787, 0
    %791 = vmatpush.bf16.msra.mxu0 0
    %792 = vmatpush.bf16.msra.mxu0 0
    %793 = vmatpush.bf16.msra.mxu0 0
    %794 = vmatpush.bf16.msra.mxu0 0
    %795 = vmatpush.bf16.msra.mxu0 0
    %796 = vmatpush.bf16.msra.mxu0 0
    %797 = vmatpush.bf16.msra.mxu0 %v158
    %798 = vmatpush.bf16.msra.mxu0 %v157
    %799 = vmatmul.bf16.gmra.mxu0 %v789
    %v800 = vpop.f32.mrf.mxu0
    %v801 = vadd.f32 0.0, %v800
    %v802 = vpop.f32.mrf.mxu0
    %803 = vdwg.mxu0
    %804 = vmatpush.bf16.msra.mxu0 0
    %805 = vmatpush.bf16.msra.mxu0 0
    %806 = vmatpush.bf16.msra.mxu0 0
    %807 = vmatpush.bf16.msra.mxu0 0
    %808 = vmatpush.bf16.msra.mxu0 0
    %809 = vmatpush.bf16.msra.mxu0 0
    %810 = vmatpush.bf16.msra.mxu0 %v229
    %811 = vmatpush.bf16.msra.mxu0 %v228
    %812 = vmatmul.bf16.gmra.mxu0 %v789
    %v813 = vpop.f32.mrf.mxu0
    %v814 = vadd.f32 0.0, %v813
    %v815 = vpop.f32.mrf.mxu0
    %816 = vdwg.mxu0
    %v817 = vpack.c.bf16 %v778, %v778
    %819 = vrot.lane.b32.xlu0 %v817, 32
    %v820 = vpop.permute.xlu0 %819
    %v822 = vsel %vm161, %v820, 0
    %824 = vmatpush.bf16.msra.mxu0 0
    %825 = vmatpush.bf16.msra.mxu0 0
    %826 = vmatpush.bf16.msra.mxu0 0
    %827 = vmatpush.bf16.msra.mxu0 0
    %828 = vmatpush.bf16.msra.mxu0 0
    %829 = vmatpush.bf16.msra.mxu0 0
    %830 = vmatpush.bf16.msra.mxu0 %v271
    %831 = vmatpush.bf16.msra.mxu0 %v270
    %832 = vmatmul.bf16.gmra.mxu0 %v822
    %v833 = vpop.f32.mrf.mxu0
    %v834 = vadd.f32 0.0, %v833
    %v835 = vpop.f32.mrf.mxu0
    %836 = vdwg.mxu0
    %v837 = vadd.f32 %v125, %v801
    %v838 = vxor.u32 %v837, 2147483648
    %v839 = vmul.f32 %v838, 1.442695
    %v840 = vpow.pop %v839
    %v841 = vadd.f32 %v840, 1.0
    %v842 = vrcp.pop %v841
    %v843 = vmul.f32 %v841, %v842
    %v844 = vsub.f32 1.0, %v843
    %v845 = vmul.f32 %v842, %v844
    %v846 = vadd.f32 %v842, %v845
    %vm847 = vweird.f32 %v841
    %vm848 = vweird.f32 %v842
    %vm849 = vmor %vm847, %vm848
    %v850 = vsel %vm849, %v842, %v846
    %v851 = vand.u32 2147483647, %v841
    %vm852 = vcmp.eq.f32.partialorder %v851, 8.507059e+37
    %v853 = vand.u32 %v841, 2147483648
    %v854 = vor.u32 1.1754944e-38, %v853
    %v855 = vsel %vm852, %v854, %v850
    %v856 = vmul.f32 1.0, %v855
    %v857 = vtanh.pop %v837
    %v858 = vmul.f32 %v856, %v733
    %860 = vrot.lane.b32.xlu0 %v857, 64
    %v861 = vpop.permute.xlu0 %860
    %v863 = vmul.f32 %v856, %v861
    %865 = vrot.lane.b32.xlu0 %v863, 32
    %v866 = vpop.permute.xlu0 %865
    %v868 = vadd.f32 %v858, %v866
    %v869 = vtanh.pop %v868
    %871 = vrot.lane.b32.xlu0 %v869, 64
    %v872 = vpop.permute.xlu0 %871
    %v874 = vmul.f32 %v856, %v872
    %v875 = vadd.f32 %v814, %v834
    %v876 = vadd.f32 %v875, %v330
    %v877 = vxor.u32 %v876, 2147483648
    %v878 = vmul.f32 %v877, 1.442695
    %v879 = vpow.pop %v878
    %v880 = vadd.f32 %v879, 1.0
    %v881 = vrcp.pop %v880
    %v882 = vmul.f32 %v880, %v881
    %v883 = vsub.f32 1.0, %v882
    %v884 = vmul.f32 %v881, %v883
    %v885 = vadd.f32 %v881, %v884
    %vm886 = vweird.f32 %v880
    %vm887 = vweird.f32 %v881
    %vm888 = vmor %vm886, %vm887
    %v889 = vsel %vm888, %v881, %v885
    %v890 = vand.u32 2147483647, %v880
    %vm891 = vcmp.eq.f32.partialorder %v890, 8.507059e+37
    %v892 = vand.u32 %v880, 2147483648
    %v893 = vor.u32 1.1754944e-38, %v892
    %v894 = vsel %vm891, %v893, %v889
    %v895 = vmul.f32 1.0, %v894
    %v896 = vtanh.pop %v876
    %v897 = vmul.f32 %v895, %v772
    %899 = vrot.lane.b32.xlu0 %v896, 64
    %v900 = vpop.permute.xlu0 %899
    %v902 = vmul.f32 %v895, %v900
    %904 = vrot.lane.b32.xlu0 %v902, 32
    %v905 = vpop.permute.xlu0 %904
    %v907 = vadd.f32 %v897, %v905
    %v908 = vtanh.pop %v907
    %910 = vrot.lane.b32.xlu0 %v908, 64
    %v911 = vpop.permute.xlu0 %910
    %v913 = vmul.f32 %v895, %v911
    %915 = vrot.lane.b32.xlu0 %v913, 32
    %v916 = vpop.permute.xlu0 %915
    %918 = vst.msk [vmem:[#allocation2 + $0x20] sm:$0xff] %vm161, %v916
    %v919 = vpack.c.bf16 %v874, %v874
    %921 = vrot.lane.b32.xlu0 %v919, 32
    %v922 = vpop.permute.xlu0 %921
    %v924 = vsel %vm161, %v922, 0
    %926 = vmatpush.bf16.msra.mxu0 0
    %927 = vmatpush.bf16.msra.mxu0 0
    %928 = vmatpush.bf16.msra.mxu0 0
    %929 = vmatpush.bf16.msra.mxu0 0
    %930 = vmatpush.bf16.msra.mxu0 0
    %931 = vmatpush.bf16.msra.mxu0 0
    %932 = vmatpush.bf16.msra.mxu0 %v158
    %933 = vmatpush.bf16.msra.mxu0 %v157
    %934 = vmatmul.bf16.gmra.mxu0 %v924
    %v935 = vpop.f32.mrf.mxu0
    %v936 = vadd.f32 0.0, %v935
    %v937 = vpop.f32.mrf.mxu0
    %938 = vdwg.mxu0
    %939 = vmatpush.bf16.msra.mxu0 0
    %940 = vmatpush.bf16.msra.mxu0 0
    %941 = vmatpush.bf16.msra.mxu0 0
    %942 = vmatpush.bf16.msra.mxu0 0
    %943 = vmatpush.bf16.msra.mxu0 0
    %944 = vmatpush.bf16.msra.mxu0 0
    %945 = vmatpush.bf16.msra.mxu0 %v229
    %946 = vmatpush.bf16.msra.mxu0 %v228
    %947 = vmatmul.bf16.gmra.mxu0 %v924
    %v948 = vpop.f32.mrf.mxu0
    %v949 = vadd.f32 0.0, %v948
    %v950 = vpop.f32.mrf.mxu0
    %951 = vdwg.mxu0
    %v952 = vpack.c.bf16 %v913, %v913
    %954 = vrot.lane.b32.xlu0 %v952, 32
    %v955 = vpop.permute.xlu0 %954
    %v957 = vsel %vm161, %v955, 0
    %959 = vmatpush.bf16.msra.mxu0 0
    %960 = vmatpush.bf16.msra.mxu0 0
    %961 = vmatpush.bf16.msra.mxu0 0
    %962 = vmatpush.bf16.msra.mxu0 0
    %963 = vmatpush.bf16.msra.mxu0 0
    %964 = vmatpush.bf16.msra.mxu0 0
    %965 = vmatpush.bf16.msra.mxu0 %v271
    %966 = vmatpush.bf16.msra.mxu0 %v270
    %967 = vmatmul.bf16.gmra.mxu0 %v957
    %v968 = vpop.f32.mrf.mxu0
    %v969 = vadd.f32 0.0, %v968
    %v970 = vpop.f32.mrf.mxu0
    %971 = vdwg.mxu0
    %v972 = vadd.f32 %v128, %v936
    %v973 = vxor.u32 %v972, 2147483648
    %v974 = vmul.f32 %v973, 1.442695
    %v975 = vpow.pop %v974
    %v976 = vadd.f32 %v975, 1.0
    %v977 = vrcp.pop %v976
    %v978 = vmul.f32 %v976, %v977
    %v979 = vsub.f32 1.0, %v978
    %v980 = vmul.f32 %v977, %v979
    %v981 = vadd.f32 %v977, %v980
    %vm982 = vweird.f32 %v976
    %vm983 = vweird.f32 %v977
    %vm984 = vmor %vm982, %vm983
    %v985 = vsel %vm984, %v977, %v981
    %v986 = vand.u32 2147483647, %v976
    %vm987 = vcmp.eq.f32.partialorder %v986, 8.507059e+37
    %v988 = vand.u32 %v976, 2147483648
    %v989 = vor.u32 1.1754944e-38, %v988
    %v990 = vsel %vm987, %v989, %v985
    %v991 = vmul.f32 1.0, %v990
    %v992 = vtanh.pop %v972
    %v993 = vmul.f32 %v991, %v868
    %995 = vrot.lane.b32.xlu0 %v992, 64
    %v996 = vpop.permute.xlu0 %995
    %v998 = vmul.f32 %v991, %v996
    %1000 = vrot.lane.b32.xlu0 %v998, 32
    %v1001 = vpop.permute.xlu0 %1000
    %v1003 = vadd.f32 %v993, %v1001
    %v1004 = vtanh.pop %v1003
    %1006 = vrot.lane.b32.xlu0 %v1004, 64
    %v1007 = vpop.permute.xlu0 %1006
    %v1009 = vmul.f32 %v991, %v1007
    %v1010 = vadd.f32 %v949, %v969
    %v1011 = vadd.f32 %v1010, %v330
    %v1012 = vxor.u32 %v1011, 2147483648
    %v1013 = vmul.f32 %v1012, 1.442695
    %v1014 = vpow.pop %v1013
    %v1015 = vadd.f32 %v1014, 1.0
    %v1016 = vrcp.pop %v1015
    %v1017 = vmul.f32 %v1015, %v1016
    %v1018 = vsub.f32 1.0, %v1017
    %v1019 = vmul.f32 %v1016, %v1018
    %v1020 = vadd.f32 %v1016, %v1019
    %vm1021 = vweird.f32 %v1015
    %vm1022 = vweird.f32 %v1016
    %vm1023 = vmor %vm1021, %vm1022
    %v1024 = vsel %vm1023, %v1016, %v1020
    %v1025 = vand.u32 2147483647, %v1015
    %vm1026 = vcmp.eq.f32.partialorder %v1025, 8.507059e+37
    %v1027 = vand.u32 %v1015, 2147483648
    %v1028 = vor.u32 1.1754944e-38, %v1027
    %v1029 = vsel %vm1026, %v1028, %v1024
    %v1030 = vmul.f32 1.0, %v1029
    %v1031 = vtanh.pop %v1011
    %v1032 = vmul.f32 %v1030, %v907
    %1034 = vrot.lane.b32.xlu0 %v1031, 64
    %v1035 = vpop.permute.xlu0 %1034
    %v1037 = vmul.f32 %v1030, %v1035
    %1039 = vrot.lane.b32.xlu0 %v1037, 32
    %v1040 = vpop.permute.xlu0 %1039
    %v1042 = vadd.f32 %v1032, %v1040
    %v1043 = vtanh.pop %v1042
    %1045 = vrot.lane.b32.xlu0 %v1043, 64
    %v1046 = vpop.permute.xlu0 %1045
    %v1048 = vmul.f32 %v1030, %v1046
    %1050 = vrot.lane.b32.xlu0 %v1048, 32
    %v1051 = vpop.permute.xlu0 %1050
    %1053 = vst.msk [vmem:[#allocation2 + $0x28] sm:$0xff] %vm161, %v1051
    %v1054 = vpack.c.bf16 %v1009, %v1009
    %1056 = vrot.lane.b32.xlu0 %v1054, 32
    %v1057 = vpop.permute.xlu0 %1056
    %v1059 = vsel %vm161, %v1057, 0
    %1061 = vmatpush.bf16.msra.mxu0 0
    %1062 = vmatpush.bf16.msra.mxu0 0
    %1063 = vmatpush.bf16.msra.mxu0 0
    %1064 = vmatpush.bf16.msra.mxu0 0
    %1065 = vmatpush.bf16.msra.mxu0 0
    %1066 = vmatpush.bf16.msra.mxu0 0
    %1067 = vmatpush.bf16.msra.mxu0 %v158
    %1068 = vmatpush.bf16.msra.mxu0 %v157
    %1069 = vmatmul.bf16.gmra.mxu0 %v1059
    %v1070 = vpop.f32.mrf.mxu0
    %v1071 = vadd.f32 0.0, %v1070
    %v1072 = vpop.f32.mrf.mxu0
    %1073 = vdwg.mxu0
    %1074 = vmatpush.bf16.msra.mxu0 0
    %1075 = vmatpush.bf16.msra.mxu0 0
    %1076 = vmatpush.bf16.msra.mxu0 0
    %1077 = vmatpush.bf16.msra.mxu0 0
    %1078 = vmatpush.bf16.msra.mxu0 0
    %1079 = vmatpush.bf16.msra.mxu0 0
    %1080 = vmatpush.bf16.msra.mxu0 %v229
    %1081 = vmatpush.bf16.msra.mxu0 %v228
    %1082 = vmatmul.bf16.gmra.mxu0 %v1059
    %v1083 = vpop.f32.mrf.mxu0
    %v1084 = vadd.f32 0.0, %v1083
    %v1085 = vpop.f32.mrf.mxu0
    %1086 = vdwg.mxu0
    %v1087 = vpack.c.bf16 %v1048, %v1048
    %1089 = vrot.lane.b32.xlu0 %v1087, 32
    %v1090 = vpop.permute.xlu0 %1089
    %v1092 = vsel %vm161, %v1090, 0
    %1094 = vmatpush.bf16.msra.mxu0 0
    %1095 = vmatpush.bf16.msra.mxu0 0
    %1096 = vmatpush.bf16.msra.mxu0 0
    %1097 = vmatpush.bf16.msra.mxu0 0
    %1098 = vmatpush.bf16.msra.mxu0 0
    %1099 = vmatpush.bf16.msra.mxu0 0
    %1100 = vmatpush.bf16.msra.mxu0 %v271
    %1101 = vmatpush.bf16.msra.mxu0 %v270
    %1102 = vmatmul.bf16.gmra.mxu0 %v1092
    %v1103 = vpop.f32.mrf.mxu0
    %v1104 = vadd.f32 0.0, %v1103
    %v1105 = vpop.f32.mrf.mxu0
    %1106 = vdwg.mxu0
    %v1107 = vadd.f32 %v130, %v1071
    %v1108 = vxor.u32 %v1107, 2147483648
    %v1109 = vmul.f32 %v1108, 1.442695
    %v1110 = vpow.pop %v1109
    %v1111 = vadd.f32 %v1110, 1.0
    %v1112 = vrcp.pop %v1111
    %v1113 = vmul.f32 %v1111, %v1112
    %v1114 = vsub.f32 1.0, %v1113
    %v1115 = vmul.f32 %v1112, %v1114
    %v1116 = vadd.f32 %v1112, %v1115
    %vm1117 = vweird.f32 %v1111
    %vm1118 = vweird.f32 %v1112
    %vm1119 = vmor %vm1117, %vm1118
    %v1120 = vsel %vm1119, %v1112, %v1116
    %v1121 = vand.u32 2147483647, %v1111
    %vm1122 = vcmp.eq.f32.partialorder %v1121, 8.507059e+37
    %v1123 = vand.u32 %v1111, 2147483648
    %v1124 = vor.u32 1.1754944e-38, %v1123
    %v1125 = vsel %vm1122, %v1124, %v1120
    %v1126 = vmul.f32 1.0, %v1125
    %v1127 = vtanh.pop %v1107
    %v1128 = vmul.f32 %v1126, %v1003
    %1130 = vrot.lane.b32.xlu0 %v1127, 64
    %v1131 = vpop.permute.xlu0 %1130
    %v1133 = vmul.f32 %v1126, %v1131
    %1135 = vrot.lane.b32.xlu0 %v1133, 32
    %v1136 = vpop.permute.xlu0 %1135
    %v1138 = vadd.f32 %v1128, %v1136
    %v1139 = vtanh.pop %v1138
    %1141 = vrot.lane.b32.xlu0 %v1139, 64
    %v1142 = vpop.permute.xlu0 %1141
    %v1144 = vmul.f32 %v1126, %v1142
    %v1145 = vadd.f32 %v1084, %v1104
    %v1146 = vadd.f32 %v1145, %v330
    %v1147 = vxor.u32 %v1146, 2147483648
    %v1148 = vmul.f32 %v1147, 1.442695
    %v1149 = vpow.pop %v1148
    %v1150 = vadd.f32 %v1149, 1.0
    %v1151 = vrcp.pop %v1150
    %v1152 = vmul.f32 %v1150, %v1151
    %v1153 = vsub.f32 1.0, %v1152
    %v1154 = vmul.f32 %v1151, %v1153
    %v1155 = vadd.f32 %v1151, %v1154
    %vm1156 = vweird.f32 %v1150
    %vm1157 = vweird.f32 %v1151
    %vm1158 = vmor %vm1156, %vm1157
    %v1159 = vsel %vm1158, %v1151, %v1155
    %v1160 = vand.u32 2147483647, %v1150
    %vm1161 = vcmp.eq.f32.partialorder %v1160, 8.507059e+37
    %v1162 = vand.u32 %v1150, 2147483648
    %v1163 = vor.u32 1.1754944e-38, %v1162
    %v1164 = vsel %vm1161, %v1163, %v1159
    %v1165 = vmul.f32 1.0, %v1164
    %v1166 = vtanh.pop %v1146
    %v1167 = vmul.f32 %v1165, %v1042
    %1169 = vrot.lane.b32.xlu0 %v1166, 64
    %v1170 = vpop.permute.xlu0 %1169
    %v1172 = vmul.f32 %v1165, %v1170
    %1174 = vrot.lane.b32.xlu0 %v1172, 32
    %v1175 = vpop.permute.xlu0 %1174
    %v1177 = vadd.f32 %v1167, %v1175
    %v1178 = vtanh.pop %v1177
    %1180 = vrot.lane.b32.xlu0 %v1178, 64
    %v1181 = vpop.permute.xlu0 %1180
    %v1183 = vmul.f32 %v1165, %v1181
    %1185 = vrot.lane.b32.xlu0 %v1183, 32
    %v1186 = vpop.permute.xlu0 %1185
    %1188 = vst.msk [vmem:[#allocation2 + $0x30] sm:$0xff] %vm161, %v1186
    %v1189 = vpack.c.bf16 %v1144, %v1144
    %1191 = vrot.lane.b32.xlu0 %v1189, 32
    %v1192 = vpop.permute.xlu0 %1191
    %v1194 = vsel %vm161, %v1192, 0
    %1196 = vmatpush.bf16.msra.mxu0 0
    %1197 = vmatpush.bf16.msra.mxu0 0
    %1198 = vmatpush.bf16.msra.mxu0 0
    %1199 = vmatpush.bf16.msra.mxu0 0
    %1200 = vmatpush.bf16.msra.mxu0 0
    %1201 = vmatpush.bf16.msra.mxu0 0
    %1202 = vmatpush.bf16.msra.mxu0 %v229
    %1203 = vmatpush.bf16.msra.mxu0 %v228
    %1204 = vmatmul.bf16.gmra.mxu0 %v1194
    %v1205 = vpop.f32.mrf.mxu0
    %v1206 = vadd.f32 0.0, %v1205
    %v1207 = vpop.f32.mrf.mxu0
    %1208 = vdwg.mxu0
    %v1209 = vpack.c.bf16 %v1183, %v1183
    %1211 = vrot.lane.b32.xlu0 %v1209, 32
    %v1212 = vpop.permute.xlu0 %1211
    %v1214 = vsel %vm161, %v1212, 0
    %1216 = vmatpush.bf16.msra.mxu0 0
    %1217 = vmatpush.bf16.msra.mxu0 0
    %1218 = vmatpush.bf16.msra.mxu0 0
    %1219 = vmatpush.bf16.msra.mxu0 0
    %1220 = vmatpush.bf16.msra.mxu0 0
    %1221 = vmatpush.bf16.msra.mxu0 0
    %1222 = vmatpush.bf16.msra.mxu0 %v271
    %1223 = vmatpush.bf16.msra.mxu0 %v270
    %1224 = vmatmul.bf16.gmra.mxu0 %v1214
    %v1225 = vpop.f32.mrf.mxu0
    %v1226 = vadd.f32 0.0, %v1225
    %v1227 = vpop.f32.mrf.mxu0
    %1228 = vdwg.mxu0
    %v1229 = vadd.f32 %v1206, %v1226
    %v1230 = vadd.f32 %v1229, %v330
    %v1231 = vxor.u32 %v1230, 2147483648
    %v1232 = vmul.f32 %v1231, 1.442695
    %v1233 = vpow.pop %v1232
    %v1234 = vadd.f32 %v1233, 1.0
    %v1235 = vrcp.pop %v1234
    %v1236 = vmul.f32 %v1234, %v1235
    %v1237 = vsub.f32 1.0, %v1236
    %v1238 = vmul.f32 %v1235, %v1237
    %v1239 = vadd.f32 %v1235, %v1238
    %vm1240 = vweird.f32 %v1234
    %vm1241 = vweird.f32 %v1235
    %vm1242 = vmor %vm1240, %vm1241
    %v1243 = vsel %vm1242, %v1235, %v1239
    %v1244 = vand.u32 2147483647, %v1234
    %vm1245 = vcmp.eq.f32.partialorder %v1244, 8.507059e+37
    %v1246 = vand.u32 %v1234, 2147483648
    %v1247 = vor.u32 1.1754944e-38, %v1246
    %v1248 = vsel %vm1245, %v1247, %v1243
    %v1249 = vmul.f32 1.0, %v1248
    %v1250 = vtanh.pop %v1230
    %v1251 = vmul.f32 %v1249, %v1177
    %1253 = vrot.lane.b32.xlu0 %v1250, 64
    %v1254 = vpop.permute.xlu0 %1253
    %v1256 = vmul.f32 %v1249, %v1254
    %1258 = vrot.lane.b32.xlu0 %v1256, 32
    %v1259 = vpop.permute.xlu0 %1258
    %v1261 = vadd.f32 %v1251, %v1259
    %v1262 = vtanh.pop %v1261
    %1264 = vrot.lane.b32.xlu0 %v1262, 64
    %v1265 = vpop.permute.xlu0 %1264
    %v1267 = vmul.f32 %v1249, %v1265
    %1269 = vrot.lane.b32.xlu0 %v1267, 32
    %v1270 = vpop.permute.xlu0 %1269
    %1272 = vst.msk [vmem:[#allocation2 + $0x38] sm:$0xff] %vm161, %v1270
    %1274 = vrot.lane.b32.xlu0 %v1144, 32
    %v1275 = vpop.permute.xlu0 %1274
    %1277 = vst.msk [vmem:[#allocation3] sm:$0xff] %vm161, %v1275
    %1279 = vrot.lane.b32.xlu0 %v1138, 96
    %v1280 = vpop.permute.xlu0 %1279
    %1282 = vst.msk [vmem:[#allocation5] sm:$0xff] %vm161, %v1280
    %s1283 = scalar_lea.vmem [#allocation3], 8
    %1284 = vst.msk [vmem:[%s1283] sm:$0xff] %vm161, %v1270
    %1286 = vrot.lane.b32.xlu0 %v1261, 96
    %v1287 = vpop.permute.xlu0 %1286
    %s1289 = scalar_lea.vmem [#allocation5], 8
    %1290 = vst.msk [vmem:[%s1289] sm:$0xff] %vm161, %v1287
    %v1291 = vld [vmem:[#allocation2] sm:$0xff]
    %v1292 = vld [vmem:[#allocation2 + $0x8] sm:$0xff]
    %v1293 = vld [vmem:[#allocation2 + $0x10] sm:$0xff]
    %v1294 = vld [vmem:[#allocation2 + $0x18] sm:$0xff]
    %v1295 = vld [vmem:[#allocation2 + $0x20] sm:$0xff]
    %v1296 = vld [vmem:[#allocation2 + $0x28] sm:$0xff]
    %v1297 = vld [vmem:[#allocation2 + $0x30] sm:$0xff]
    %v1298 = vld [vmem:[#allocation2 + $0x38] sm:$0xff]
    %v1299 = vld [vmem:[%s7] sm:$0xf]
    %v1300 = vld [vmem:[%s7 + $0x4] sm:$0xf]
    %v1301 = vld [vmem:[%s7 + $0x8] sm:$0xf]
    %v1302 = vld [vmem:[%s7 + $0xc] sm:$0xf]
    %v1303 = vpack.c.bf16 %v1292, %v1291
    %v1304 = vpack.c.bf16 %v1294, %v1293
    %v1305 = vpack.c.bf16 %v1296, %v1295
    %v1306 = vpack.c.bf16 %v1298, %v1297
    %v1307 = vld [vmem:[%s8] sm:$0x1]
    %v1309 = vperm.slane %v1307, 0
    %v1315 = vunpack.c.l.b16 %v1299
    %v1316 = vunpack.c.l.b16 %v1300
    %v1317 = vunpack.c.l.b16 %v1301
    %v1318 = vunpack.c.l.b16 %v1302
    %v1319 = vpack.c.b16 %v1316, %v1315
    %v1320 = vpack.c.b16 %v1318, %v1317
    %v1324 = vsel %vm161, %v1303, 0
    %v1327 = vsel %vm161, %v1304, 0
    %v1330 = vsel %vm161, %v1305, 0
    %v1333 = vsel %vm161, %v1306, 0
    %1335 = vmatpush.bf16.msra.mxu0 0
    %1336 = vmatpush.bf16.msra.mxu0 0
    %1337 = vmatpush.bf16.msra.mxu0 0
    %1338 = vmatpush.bf16.msra.mxu0 0
    %1339 = vmatpush.bf16.msra.mxu0 0
    %1340 = vmatpush.bf16.msra.mxu0 0
    %1341 = vmatpush.bf16.msra.mxu0 %v1320
    %1342 = vmatpush.bf16.msra.mxu0 %v1319
    %1343 = vmatmul.bf16.gmra.mxu0 %v1324
    %v1344 = vpop.f32.mrf.mxu0
    %v1345 = vadd.f32 %v1309, %v1344
    %v1346 = vpop.f32.mrf.mxu0
    %v1347 = vadd.f32 %v1309, %v1346
    %1348 = vmatmul.bf16.gmra.mxu0 %v1327
    %v1349 = vpop.f32.mrf.mxu0
    %v1350 = vadd.f32 %v1309, %v1349
    %v1351 = vpop.f32.mrf.mxu0
    %v1352 = vadd.f32 %v1309, %v1351
    %1353 = vmatmul.bf16.gmra.mxu0 %v1330
    %v1354 = vpop.f32.mrf.mxu0
    %v1355 = vadd.f32 %v1309, %v1354
    %v1356 = vpop.f32.mrf.mxu0
    %v1357 = vadd.f32 %v1309, %v1356
    %1358 = vmatmul.bf16.gmra.mxu0 %v1333
    %v1359 = vpop.f32.mrf.mxu0
    %v1360 = vadd.f32 %v1309, %v1359
    %v1361 = vpop.f32.mrf.mxu0
    %v1362 = vadd.f32 %v1309, %v1361
    %1363 = vdwg.mxu0
    %v1364 = vmax.f32 %v1345, 0.0
    %v1365 = vmax.f32 %v1347, 0.0
    %v1366 = vmax.f32 %v1350, 0.0
    %v1367 = vmax.f32 %v1352, 0.0
    %v1368 = vmax.f32 %v1355, 0.0
    %v1369 = vmax.f32 %v1357, 0.0
    %v1370 = vmax.f32 %v1360, 0.0
    %v1371 = vmax.f32 %v1362, 0.0
    %v1372 = vld [vmem:[%s9] sm:$0xf]
    %v1373 = vld [vmem:[%s9 + $0x4] sm:$0xf]
    %v1374 = vld [vmem:[%s9 + $0x8] sm:$0xf]
    %v1375 = vld [vmem:[%s9 + $0xc] sm:$0xf]
    %v1376 = vpack.c.bf16 %v1365, %v1364
    %v1377 = vpack.c.bf16 %v1367, %v1366
    %v1378 = vpack.c.bf16 %v1369, %v1368
    %v1379 = vpack.c.bf16 %v1371, %v1370
    %v1380 = vld [vmem:[%s10] sm:$0x1]
    %v1382 = vperm.slane %v1380, 0
    %v1388 = vunpack.c.l.b16 %v1372
    %v1389 = vunpack.c.l.b16 %v1373
    %v1390 = vunpack.c.l.b16 %v1374
    %v1391 = vunpack.c.l.b16 %v1375
    %v1392 = vpack.c.b16 %v1389, %v1388
    %v1393 = vpack.c.b16 %v1391, %v1390
    %v1397 = vsel %vm161, %v1376, 0
    %v1400 = vsel %vm161, %v1377, 0
    %v1403 = vsel %vm161, %v1378, 0
    %v1406 = vsel %vm161, %v1379, 0
    %1408 = vmatpush.bf16.msra.mxu0 0
    %1409 = vmatpush.bf16.msra.mxu0 0
    %1410 = vmatpush.bf16.msra.mxu0 0
    %1411 = vmatpush.bf16.msra.mxu0 0
    %1412 = vmatpush.bf16.msra.mxu0 0
    %1413 = vmatpush.bf16.msra.mxu0 0
    %1414 = vmatpush.bf16.msra.mxu0 %v1393
    %1415 = vmatpush.bf16.msra.mxu0 %v1392
    %1416 = vmatmul.bf16.gmra.mxu0 %v1397
    %v1417 = vpop.f32.mrf.mxu0
    %v1418 = vadd.f32 %v1382, %v1417
    %v1419 = vpop.f32.mrf.mxu0
    %v1420 = vadd.f32 %v1382, %v1419
    %1421 = vmatmul.bf16.gmra.mxu0 %v1400
    %v1422 = vpop.f32.mrf.mxu0
    %v1423 = vadd.f32 %v1382, %v1422
    %v1424 = vpop.f32.mrf.mxu0
    %v1425 = vadd.f32 %v1382, %v1424
    %1426 = vmatmul.bf16.gmra.mxu0 %v1403
    %v1427 = vpop.f32.mrf.mxu0
    %v1428 = vadd.f32 %v1382, %v1427
    %v1429 = vpop.f32.mrf.mxu0
    %v1430 = vadd.f32 %v1382, %v1429
    %1431 = vmatmul.bf16.gmra.mxu0 %v1406
    %v1432 = vpop.f32.mrf.mxu0
    %v1433 = vadd.f32 %v1382, %v1432
    %v1434 = vpop.f32.mrf.mxu0
    %v1435 = vadd.f32 %v1382, %v1434
    %1436 = vdwg.mxu0
    %v1437 = vmax.f32 %v1418, 0.0
    %v1438 = vmax.f32 %v1420, 0.0
    %v1439 = vmax.f32 %v1423, 0.0
    %v1440 = vmax.f32 %v1425, 0.0
    %v1441 = vmax.f32 %v1428, 0.0
    %v1442 = vmax.f32 %v1430, 0.0
    %v1443 = vmax.f32 %v1433, 0.0
    %v1444 = vmax.f32 %v1435, 0.0
    %v1445 = vld [vmem:[%s11] sm:$0xf]
    %v1446 = vld [vmem:[%s11 + $0x4] sm:$0xf]
    %v1447 = vld [vmem:[%s11 + $0x8] sm:$0xf]
    %v1448 = vld [vmem:[%s11 + $0xc] sm:$0xf]
    %v1449 = vpack.c.bf16 %v1438, %v1437
    %v1450 = vpack.c.bf16 %v1440, %v1439
    %v1451 = vpack.c.bf16 %v1442, %v1441
    %v1452 = vpack.c.bf16 %v1444, %v1443
    %v1453 = vld [vmem:[%s12] sm:$0x1]
    %v1455 = vperm.slane %v1453, 0
    %v1461 = vunpack.c.l.b16 %v1445
    %v1462 = vunpack.c.l.b16 %v1446
    %v1463 = vunpack.c.l.b16 %v1447
    %v1464 = vunpack.c.l.b16 %v1448
    %v1465 = vpack.c.b16 %v1462, %v1461
    %v1466 = vpack.c.b16 %v1464, %v1463
    %v1470 = vsel %vm161, %v1449, 0
    %v1473 = vsel %vm161, %v1450, 0
    %v1476 = vsel %vm161, %v1451, 0
    %v1479 = vsel %vm161, %v1452, 0
    %1481 = vmatpush.bf16.msra.mxu0 0
    %1482 = vmatpush.bf16.msra.mxu0 0
    %1483 = vmatpush.bf16.msra.mxu0 0
    %1484 = vmatpush.bf16.msra.mxu0 0
    %1485 = vmatpush.bf16.msra.mxu0 0
    %1486 = vmatpush.bf16.msra.mxu0 0
    %1487 = vmatpush.bf16.msra.mxu0 %v1466
    %1488 = vmatpush.bf16.msra.mxu0 %v1465
    %1489 = vmatmul.bf16.gmra.mxu0 %v1470
    %v1490 = vpop.f32.mrf.mxu0
    %v1491 = vadd.f32 %v1455, %v1490
    %v1492 = vpop.f32.mrf.mxu0
    %v1493 = vadd.f32 %v1455, %v1492
    %1494 = vmatmul.bf16.gmra.mxu0 %v1473
    %v1495 = vpop.f32.mrf.mxu0
    %v1496 = vadd.f32 %v1455, %v1495
    %v1497 = vpop.f32.mrf.mxu0
    %v1498 = vadd.f32 %v1455, %v1497
    %1499 = vmatmul.bf16.gmra.mxu0 %v1476
    %v1500 = vpop.f32.mrf.mxu0
    %v1501 = vadd.f32 %v1455, %v1500
    %v1502 = vpop.f32.mrf.mxu0
    %v1503 = vadd.f32 %v1455, %v1502
    %1504 = vmatmul.bf16.gmra.mxu0 %v1479
    %v1505 = vpop.f32.mrf.mxu0
    %v1506 = vadd.f32 %v1455, %v1505
    %v1507 = vpop.f32.mrf.mxu0
    %v1508 = vadd.f32 %v1455, %v1507
    %1509 = vdwg.mxu0
    %v1510 = vlaneseq
    %v1511 = vand.u32 %v1510, 127
    %v1512 = vmax.f32 %v1491, -20.0
    %v1513 = vmax.f32 %v1493, -20.0
    %v1514 = vmax.f32 %v1496, -20.0
    %v1515 = vmax.f32 %v1498, -20.0
    %v1516 = vmax.f32 %v1501, -20.0
    %v1517 = vmax.f32 %v1503, -20.0
    %v1518 = vmax.f32 %v1506, -20.0
    %v1519 = vmax.f32 %v1508, -20.0
    %v1520 = vmin.f32 %v1512, 2.0
    %v1521 = vmin.f32 %v1513, 2.0
    %v1522 = vmin.f32 %v1514, 2.0
    %v1523 = vmin.f32 %v1515, 2.0
    %v1524 = vmin.f32 %v1516, 2.0
    %v1525 = vmin.f32 %v1517, 2.0
    %v1526 = vmin.f32 %v1518, 2.0
    %v1527 = vmin.f32 %v1519, 2.0
    %vm1528 = vcmp.ge.s32.totalorder %v1511, 4
    %v1529 = vsel %vm1528, %v1520, %v1491
    %v1530 = vsel %vm1528, %v1521, %v1493
    %v1531 = vsel %vm1528, %v1522, %v1496
    %v1532 = vsel %vm1528, %v1523, %v1498
    %v1533 = vsel %vm1528, %v1524, %v1501
    %v1534 = vsel %vm1528, %v1525, %v1503
    %v1535 = vsel %vm1528, %v1526, %v1506
    %v1536 = vsel %vm1528, %v1527, %v1508
    %vm1537 = vcmask 64512
    %1538 = vst.msk [vmem:[%s13] sm:$0xff] %vm1537, %v1529
    %1539 = vst.msk [vmem:[%s13 + $0x8] sm:$0xff] %vm1537, %v1530
    %1540 = vst.msk [vmem:[%s13 + $0x10] sm:$0xff] %vm1537, %v1531
    %1541 = vst.msk [vmem:[%s13 + $0x18] sm:$0xff] %vm1537, %v1532
    %1542 = vst.msk [vmem:[%s13 + $0x20] sm:$0xff] %vm1537, %v1533
    %1543 = vst.msk [vmem:[%s13 + $0x28] sm:$0xff] %vm1537, %v1534
    %1544 = vst.msk [vmem:[%s13 + $0x30] sm:$0xff] %vm1537, %v1535
    %1545 = vst.msk [vmem:[%s13 + $0x38] sm:$0xff] %vm1537, %v1536
    // Predicated region
    $region54: #{gaussian_policy_forward.1} parent=1 // pred_check
      _
    $region55: #{gaussian_policy_forward.1} parent=1 // pred_check_branch
      %1547 = sbr.rel (0) target = $region57
    $region56: #{gaussian_policy_forward.1} parent=1 // pred_region
      _
    $region57: #{gaussian_policy_forward.1} parent=1 // pred_fallthru
      _
    // Predicated region
    $region58: #{gaussian_policy_forward.1} parent=1 // pred_check
      _
    $region59: #{gaussian_policy_forward.1} parent=1 // pred_check_branch
      %1549 = sbr.rel (0) target = $region61
    $region60: #{gaussian_policy_forward.1} parent=1 // pred_region
      %1551 = vsyncadd [#allocation4], 0
      %s1552 = sshll.u32 [#allocation3], 4
      %s1553 = int_to_ptr.vmem [resolvable:$true] %s1552
      %s1554 = sshll.u32 %s14, 4
      %s1555 = int_to_ptr.hbm [resolvable:$true] %s1554
      %1560 = dma.vmem_to_hbm [thread:$0]  %s1553, 256, %s1555, [#allocation4], 128, 128, 8
    $region61: #{gaussian_policy_forward.1} parent=1 // pred_fallthru
      _
    // Predicated region
    $region62: #{gaussian_policy_forward.1} parent=1 // pred_check
      _
    $region63: #{gaussian_policy_forward.1} parent=1 // pred_check_branch
      %1562 = sbr.rel (0) target = $region65
    $region64: #{gaussian_policy_forward.1} parent=1 // pred_region
      %1564 = vsyncadd [#allocation6], 0
      %s1565 = sshll.u32 [#allocation5], 4
      %s1566 = int_to_ptr.vmem [resolvable:$true] %s1565
      %s1567 = sshll.u32 %s15, 4
      %s1568 = int_to_ptr.hbm [resolvable:$true] %s1567
      %1573 = dma.vmem_to_hbm [thread:$0]  %s1566, 256, %s1568, [#allocation6], 128, 128, 8
    $region65: #{gaussian_policy_forward.1} parent=1 // pred_fallthru
      _
    // Predicated region
    $region66: #{gaussian_policy_forward.1} parent=1 // pred_check
      _
    $region67: #{gaussian_policy_forward.1} parent=1 // pred_check_branch
      %1575 = sbr.rel (0) target = $region69
    $region68: #{gaussian_policy_forward.1} parent=1 // pred_region
      _
    $region69: #{gaussian_policy_forward.1} parent=1 // pred_fallthru
      _
    // Predicated region
    $region70: #{gaussian_policy_forward.1} parent=1 // pred_check
      _
    $region71: #{gaussian_policy_forward.1} parent=1 // pred_check_branch
      %1577 = sbr.rel (0) target = $region73
    $region72: #{gaussian_policy_forward.1} parent=1 // pred_region
      %1579 = dma.done [#allocation4], 256
    $region73: #{gaussian_policy_forward.1} parent=1 // pred_fallthru
      _
    // Predicated region
    $region74: #{gaussian_policy_forward.1} parent=1 // pred_check
      _
    $region75: #{gaussian_policy_forward.1} parent=1 // pred_check_branch
      %1581 = sbr.rel (0) target = $region77
    $region76: #{gaussian_policy_forward.1} parent=1 // pred_region
      %1583 = dma.done [#allocation6], 256
    $region77: #{gaussian_policy_forward.1} parent=1 // pred_fallthru
      _
    %1584 = vsyncpa [#allocation4], 1
    %1585 = vsyncpa [#allocation6], 1

</llo_original>
